<compile_context>
chip_gen: v6e
topology: v6e:2x2x1
jax: 0.10.0
libtpu: 0.0.40
codegen_flags: <defaults>
</compile_context>

<pallas_src>
import functools

import jax
import jax.numpy as jnp
from jax import lax
from jax.experimental import pallas as pl
from jax.experimental.pallas import tpu as pltpu


def _spatial_attention_kernel(w_ref, x_ref, o_ref, *, C, H, W, K, CC, CHUNK_ACC):
    """One batch-block per grid step.

    w_ref : SMEM (2*K*K,) f32   -- conv weight, layout [in_ch, kh, kw] flattened
    x_ref : VMEM (Nb, C, H*W)   -- input block (lane-dense last dim)
    o_ref : VMEM (Nb, C, H*W)   -- output block
    """
    pad = K // 2
    Nb = x_ref.shape[0]
    HW = H * W
    f32 = jnp.float32

    n_full = C // CC
    tail = C - n_full * CC
    unroll_loops = n_full <= 8

    def _load_f32(off, size):
        return x_ref[:, pl.ds(off, size), :].astype(f32)

    # ---- channel mean / max (torch.mean / torch.max over dim=1), streamed over C.
    if CHUNK_ACC:
        # Chunk-shaped accumulators: loop body is pure vld + VALU; the sublane
        # (axis=1) reduction happens once after the loop.
        def _reduce_body(i, carry):
            s, m = carry
            off = pl.multiple_of(i * CC, CC)
            c = _load_f32(off, CC)
            return s + c, jnp.maximum(m, c)

        init = (jnp.zeros((Nb, CC, HW), f32),
                jnp.full((Nb, CC, HW), -jnp.inf, f32))
        s3, m3 = lax.fori_loop(0, n_full, _reduce_body, init, unroll=unroll_loops)
        x_sum = jnp.sum(s3, axis=1)
        x_max = jnp.max(m3, axis=1)
    else:
        def _reduce_body(i, carry):
            s, m = carry
            off = pl.multiple_of(i * CC, CC)
            c = _load_f32(off, CC)
            return s + jnp.sum(c, axis=1), jnp.maximum(m, jnp.max(c, axis=1))

        init = (jnp.zeros((Nb, HW), f32),
                jnp.full((Nb, HW), -jnp.inf, f32))
        x_sum, x_max = lax.fori_loop(0, n_full, _reduce_body, init,
                                     unroll=unroll_loops)

    if tail:  # statically-shaped tail chunk (CC need not divide C)
        c = _load_f32(n_full * CC, tail)
        x_sum = x_sum + jnp.sum(c, axis=1)
        x_max = jnp.maximum(x_max, jnp.max(c, axis=1))

    x_avg = x_sum * (1.0 / C)                                    # (Nb, HW)

    # ---- zero-pad the two pooled planes ONCE.  Flat padding of S on both sides
    #      covers every row shift; column wrap is handled by masks below.
    S = pad * W + pad
    Wp = HW + 2 * pad                      # width of each row-shifted working copy
    if S > 0:
        zpad = jnp.zeros((Nb, S), f32)
        avg_p = jnp.concatenate([zpad, x_avg, zpad], axis=-1)    # (Nb, HW + 2S)
        max_p = jnp.concatenate([zpad, x_max, zpad], axis=-1)
    else:                                   # K == 1
        avg_p, max_p = x_avg, x_max

    # ---- column-validity masks (rows out of range already read padding zeros).
    pos = lax.broadcasted_iota(jnp.int32, (1, HW), 1)
    if (W & (W - 1)) == 0:
        col = jnp.bitwise_and(pos, W - 1)
    else:
        col = lax.rem(pos, W)
    col_masks = [None if dw == pad
                 else ((col >= pad - dw) & (col < W + pad - dw))
                 for dw in range(K)]

    # ---- 2-in-channel KxK cross-correlation (nn.Conv2d, bias=False), factored
    #      into row shifts (2K static slices, width HW+2*pad) -> scalar FMAs
    #      (2*K*K) -> column shifts (K static slices) + masks.
    inner = [jnp.zeros((Nb, Wp), f32) for _ in range(K)]
    for dh in range(K):
        lo = S + (dh - pad) * W - pad                  # in-bounds by construction
        ra = avg_p[:, lo:lo + Wp]
        rm = max_p[:, lo:lo + Wp]
        for dw in range(K):
            w_a = w_ref[dh * K + dw]                   # SMEM scalar reads
            w_m = w_ref[K * K + dh * K + dw]
            inner[dw] = inner[dw] + w_a * ra + w_m * rm

    acc = jnp.zeros((Nb, HW), f32)
    for dw in range(K):
        v = inner[dw][:, dw:dw + HW]                   # column shift of (dw - pad)
        m = col_masks[dw]
        acc = acc + (jnp.where(m, v, 0.0) if m is not None else v)

    attn = jax.nn.sigmoid(acc)                                   # (Nb, HW) f32

    # ---- gate: out = x * sigmoid(conv), streamed over C.
    #      Broadcast hoisted once (JAX does not CSE broadcast_in_dim).
    gate_full = jnp.broadcast_to(attn[:, None, :], (Nb, CC, HW))

    @pl.loop(0, n_full, unroll=unroll_loops)
    def _gate_loop(i):
        off = pl.multiple_of(i * CC, CC)
        c = _load_f32(off, CC)
        o_ref[:, pl.ds(off, CC), :] = (c * gate_full).astype(o_ref.dtype)

    if tail:
        c = _load_f32(n_full * CC, tail)
        o_ref[:, pl.ds(n_full * CC, tail), :] = (
            c * gate_full[:, :tail, :]).astype(o_ref.dtype)


def _pick_batch_block(N, per_batch_bytes, hw,
                      budget_bytes=4 * 1024 * 1024, min_steps=4):
    """Largest divisor of N fitting the VMEM/vreg budget.

    Prefers >= min_steps grid steps and an even step count so a 2-TensorCore
    chip (v7x) gets a balanced, pipelined split of the 'parallel' batch axis.
    """
    divisors = [d for d in range(1, N + 1) if N % d == 0]

    def fits(d):
        # budget ~= block bytes (in + out double-buffered is ~4x, accounted for
        # when deriving vmem_limit); d*hw bounds the conv working-set residency.
        return d * per_batch_bytes <= budget_bytes and d * hw <= 65536

    for steps_req, need_even in ((min_steps, True), (min_steps, False),
                                 (2, True), (2, False)):
        ok = [d for d in divisors
              if fits(d) and N // d >= steps_req
              and (not need_even or (N // d) % 2 == 0)]
        if ok:
            return max(ok)
    ok = [d for d in divisors if fits(d)]
    return max(ok) if ok else 1


def _pick_channel_chunk(C, HW, Nb, itemsize, target_elems=8192):
    """Sublane-aligned channel chunk (>= one full tile); tail handled in-kernel."""
    tile = 16 if itemsize == 2 else 8        # bf16 packs 2 rows per sublane
    if C <= tile:
        return C
    cap = max(1, target_elems // max(1, Nb * HW))
    cc = max(tile, (cap // tile) * tile)     # multiple of the sublane tile
    return min(cc, C)


def spatial_attention(x, weight, *, donate_x=False):
    """x: (N, C, H, W); weight: (1, 2, K, K)  (nn.Conv2d(2,1,K,pad=K//2,bias=False))."""
    N, C, H, W = x.shape
    O, cin, K, K2 = weight.shape
    assert O == 1 and cin == 2 and K == K2, "expected Conv2d(2, 1, K) weight"
    assert K % 2 == 1, "flattened-shift conv assumes odd K (pad = K//2 centered)"
    HW = H * W

    w_flat = weight.reshape(2 * K * K).astype(jnp.float32)
    xf = x.reshape(N, C, HW)                      # layout plumbing only

    per_batch_bytes = C * HW * x.dtype.itemsize
    Nb = _pick_batch_block(N, per_batch_bytes, HW)
    CC = _pick_channel_chunk(C, HW, Nb, x.dtype.itemsize)
    chunk_acc = Nb * CC * HW <= 8192              # 2 chunk-shaped f32 accs fit vregs

    # VMEM budget: in + out blocks, double buffered (~4x block bytes) + headroom.
    block_bytes = Nb * per_batch_bytes
    vmem_cap = 64 * 1024 * 1024                   # conservative (v7x per-TC VMEM)
    try:
        vmem_cap = int(pltpu.get_tpu_info().vmem_capacity_bytes)
    except Exception:
        pass
    vmem_limit = max(32 * 1024 * 1024, 4 * block_bytes + 8 * 1024 * 1024)
    vmem_limit = int(min(vmem_limit, vmem_cap))
    # TODO(synk): if even Nb=1 exceeds vmem_cap (huge C*HW on v7x), switch to a
    #             C-tiled manual-DMA path instead of relying on this clamp.

    kernel = functools.partial(_spatial_attention_kernel,
                               C=C, H=H, W=W, K=K, CC=CC, CHUNK_ACC=chunk_acc)
    out_flat = pl.pallas_call(
        kernel,
        out_shape=jax.ShapeDtypeStruct((N, C, HW), x.dtype),
        grid_spec=pltpu.PrefetchScalarGridSpec(
            num_scalar_prefetch=0,
            grid=(N // Nb,),
            in_specs=[
                pl.BlockSpec(memory_space=pltpu.MemorySpace.SMEM),   # conv weight
                pl.BlockSpec((Nb, C, HW), lambda n: (n, 0, 0)),      # x block
            ],
            out_specs=pl.BlockSpec((Nb, C, HW), lambda n: (n, 0, 0)),
        ),
        compiler_params=pltpu.CompilerParams(
            dimension_semantics=("parallel",),      # megacore-shard batch blocks
            vmem_limit_bytes=vmem_limit,
        ),
        input_output_aliases=({1: 0} if donate_x else {}),
    )(w_flat, xf)
    return out_flat.reshape(N, C, H, W)


def spatial_attention_ref(x, weight):
    """Pure-JAX reference (mirrors the PyTorch forward exactly)."""
    K = weight.shape[-1]
    pad = K // 2
    avg = jnp.mean(x, axis=1, keepdims=True)
    mx = jnp.max(x, axis=1, keepdims=True)
    feat = jnp.concatenate([avg, mx], axis=1)             # (N, 2, H, W)
    conv = jax.lax.conv_general_dilated(
        feat, weight, window_strides=(1, 1),
        padding=[(pad, pad), (pad, pad)],
        dimension_numbers=("NCHW", "OIHW", "NCHW"))
    return x * jax.nn.sigmoid(conv)


if __name__ == "__main__":
    key = jax.random.PRNGKey(0)
    kx, kw = jax.random.split(key)

    N, C, H, W, K = 2, 4, 16, 16, 7
    x = jax.random.normal(kx, (N, C, H, W), dtype=jnp.float32)

    # Deterministic Conv2d(2, 1, 7, bias=False) weight init (uniform +/- 1/sqrt(fan_in)).
    fan_in = 2 * K * K
    bound = 1.0 / (fan_in ** 0.5)
    weight = jax.random.uniform(kw, (1, 2, K, K), jnp.float32, -bound, bound)

    out = jax.block_until_ready(spatial_attention(x, weight))

    ref = spatial_attention_ref(x, weight)
    assert out.shape == x.shape and out.dtype == x.dtype
    err = float(jnp.max(jnp.abs(out - ref)))
    assert jnp.allclose(out, ref, atol=1e-4, rtol=1e-4), err
    print("KERNEL_OK")
</pallas_src>

<mosaic_0001>
module attributes {stable_mosaic.version = 11 : i64} {
  func.func @_spatial_attention_kernel(%arg0: i32, %arg1: memref<98xf32, #tpu.memory_space<smem>>, %arg2: memref<1x4x256xf32, #tpu.memory_space<vmem>>, %arg3: memref<1x4x256xf32, #tpu.memory_space<vmem>>) attributes {dimension_semantics = [#tpu.dimension_semantics<parallel>], iteration_bounds = array<i64: 2>, scalar_prefetch = 0 : i64, scratch_operands = 0 : i64, tpu.core_type = #tpu.core_type<tc>, window_params = [{transform_indices = @transform_0, window_bounds = array<i64: 98>}, {transform_indices = @transform_1, window_bounds = array<i64: 1, 4, 256>}, {transform_indices = @transform_2, window_bounds = array<i64: 1, 4, 256>}]} {
    %cst = arith.constant 0.000000e+00 : f32
    %0 = vector.broadcast %cst : f32 to vector<1x4x256xf32>
    %cst_0 = arith.constant 0xFF800000 : f32
    %1 = vector.broadcast %cst_0 : f32 to vector<1x4x256xf32>
    %c0_i32 = arith.constant 0 : i32
    %c4_i32 = arith.constant 4 : i32
    %2 = arith.muli %c0_i32, %c4_i32 : i32
    %3 = tpu.assume_multiple %2, 4 : i32
    %c0 = arith.constant 0 : index
    %4 = arith.index_cast %3 : i32 to index
    %c0_1 = arith.constant 0 : index
    %5 = vector.load %arg2[%c0, %4, %c0_1] : memref<1x4x256xf32, #tpu.memory_space<vmem>>, vector<1x4x256xf32>
    %6 = arith.addf %0, %5 : vector<1x4x256xf32>
    %7 = arith.maximumf %1, %5 : vector<1x4x256xf32>
    %c1_i32 = arith.constant 1 : i32
    %cst_2 = arith.constant dense<0.000000e+00> : vector<1x256xf32>
    %8 = vector.multi_reduction <add>, %6, %cst_2 [1] : vector<1x4x256xf32> to vector<1x256xf32>
    %cst_3 = arith.constant dense<0xFF800000> : vector<1x256xf32>
    %9 = vector.multi_reduction <maximumf>, %7, %cst_3 [1] : vector<1x4x256xf32> to vector<1x256xf32>
    %cst_4 = arith.constant 2.500000e-01 : f32
    %10 = vector.broadcast %cst_4 : f32 to vector<1x256xf32>
    %11 = arith.mulf %8, %10 : vector<1x256xf32>
    %cst_5 = arith.constant 0.000000e+00 : f32
    %12 = vector.broadcast %cst_5 : f32 to vector<1x51xf32>
    %13 = tpu.concatenate %12, %11, %12 in 1 : vector<1x51xf32>, vector<1x256xf32>, vector<1x51xf32> -> vector<1x358xf32>
    %14 = tpu.concatenate %12, %9, %12 in 1 : vector<1x51xf32>, vector<1x256xf32>, vector<1x51xf32> -> vector<1x358xf32>
    %15 = tpu.iota {dimensions = array<i32: 1>} : vector<1x256xi32>
    %c15_i32 = arith.constant 15 : i32
    %16 = vector.broadcast %c15_i32 : i32 to vector<1x256xi32>
    %17 = arith.andi %15, %16 : vector<1x256xi32>
    %c3_i32 = arith.constant 3 : i32
    %18 = vector.broadcast %c3_i32 : i32 to vector<1x256xi32>
    %19 = arith.cmpi sge, %17, %18 : vector<1x256xi32>
    %c19_i32 = arith.constant 19 : i32
    %20 = vector.broadcast %c19_i32 : i32 to vector<1x256xi32>
    %21 = arith.cmpi slt, %17, %20 : vector<1x256xi32>
    %22 = arith.andi %19, %21 : vector<1x256xi1>
    %c2_i32 = arith.constant 2 : i32
    %23 = vector.broadcast %c2_i32 : i32 to vector<1x256xi32>
    %24 = arith.cmpi sge, %17, %23 : vector<1x256xi32>
    %c18_i32 = arith.constant 18 : i32
    %25 = vector.broadcast %c18_i32 : i32 to vector<1x256xi32>
    %26 = arith.cmpi slt, %17, %25 : vector<1x256xi32>
    %27 = arith.andi %24, %26 : vector<1x256xi1>
    %c1_i32_6 = arith.constant 1 : i32
    %28 = vector.broadcast %c1_i32_6 : i32 to vector<1x256xi32>
    %29 = arith.cmpi sge, %17, %28 : vector<1x256xi32>
    %c17_i32 = arith.constant 17 : i32
    %30 = vector.broadcast %c17_i32 : i32 to vector<1x256xi32>
    %31 = arith.cmpi slt, %17, %30 : vector<1x256xi32>
    %32 = arith.andi %29, %31 : vector<1x256xi1>
    %c-1_i32 = arith.constant -1 : i32
    %33 = vector.broadcast %c-1_i32 : i32 to vector<1x256xi32>
    %34 = arith.cmpi sge, %17, %33 : vector<1x256xi32>
    %c15_i32_7 = arith.constant 15 : i32
    %35 = vector.broadcast %c15_i32_7 : i32 to vector<1x256xi32>
    %36 = arith.cmpi slt, %17, %35 : vector<1x256xi32>
    %37 = arith.andi %34, %36 : vector<1x256xi1>
    %c-2_i32 = arith.constant -2 : i32
    %38 = vector.broadcast %c-2_i32 : i32 to vector<1x256xi32>
    %39 = arith.cmpi sge, %17, %38 : vector<1x256xi32>
    %c14_i32 = arith.constant 14 : i32
    %40 = vector.broadcast %c14_i32 : i32 to vector<1x256xi32>
    %41 = arith.cmpi slt, %17, %40 : vector<1x256xi32>
    %42 = arith.andi %39, %41 : vector<1x256xi1>
    %c-3_i32 = arith.constant -3 : i32
    %43 = vector.broadcast %c-3_i32 : i32 to vector<1x256xi32>
    %44 = arith.cmpi sge, %17, %43 : vector<1x256xi32>
    %c13_i32 = arith.constant 13 : i32
    %45 = vector.broadcast %c13_i32 : i32 to vector<1x256xi32>
    %46 = arith.cmpi slt, %17, %45 : vector<1x256xi32>
    %47 = arith.andi %44, %46 : vector<1x256xi1>
    %cst_8 = arith.constant 0.000000e+00 : f32
    %48 = vector.broadcast %cst_8 : f32 to vector<1x262xf32>
    %cst_9 = arith.constant 0.000000e+00 : f32
    %49 = vector.broadcast %cst_9 : f32 to vector<1x262xf32>
    %cst_10 = arith.constant 0.000000e+00 : f32
    %50 = vector.broadcast %cst_10 : f32 to vector<1x262xf32>
    %cst_11 = arith.constant 0.000000e+00 : f32
    %51 = vector.broadcast %cst_11 : f32 to vector<1x262xf32>
    %cst_12 = arith.constant 0.000000e+00 : f32
    %52 = vector.broadcast %cst_12 : f32 to vector<1x262xf32>
    %cst_13 = arith.constant 0.000000e+00 : f32
    %53 = vector.broadcast %cst_13 : f32 to vector<1x262xf32>
    %cst_14 = arith.constant 0.000000e+00 : f32
    %54 = vector.broadcast %cst_14 : f32 to vector<1x262xf32>
    %55 = vector.extract_strided_slice %13 {offsets = [0, 0], sizes = [1, 262], strides = [1, 1]} : vector<1x358xf32> to vector<1x262xf32>
    %56 = vector.extract_strided_slice %14 {offsets = [0, 0], sizes = [1, 262], strides = [1, 1]} : vector<1x358xf32> to vector<1x262xf32>
    %c0_15 = arith.constant 0 : index
    %57 = memref.load %arg1[%c0_15] : memref<98xf32, #tpu.memory_space<smem>>
    %c49 = arith.constant 49 : index
    %58 = memref.load %arg1[%c49] : memref<98xf32, #tpu.memory_space<smem>>
    %59 = vector.broadcast %57 : f32 to vector<1x262xf32>
    %60 = arith.mulf %59, %55 : vector<1x262xf32>
    %61 = arith.addf %48, %60 : vector<1x262xf32>
    %62 = vector.broadcast %58 : f32 to vector<1x262xf32>
    %63 = arith.mulf %62, %56 : vector<1x262xf32>
    %64 = arith.addf %61, %63 : vector<1x262xf32>
    %c1 = arith.constant 1 : index
    %65 = memref.load %arg1[%c1] : memref<98xf32, #tpu.memory_space<smem>>
    %c50 = arith.constant 50 : index
    %66 = memref.load %arg1[%c50] : memref<98xf32, #tpu.memory_space<smem>>
    %67 = vector.broadcast %65 : f32 to vector<1x262xf32>
    %68 = arith.mulf %67, %55 : vector<1x262xf32>
    %69 = arith.addf %49, %68 : vector<1x262xf32>
    %70 = vector.broadcast %66 : f32 to vector<1x262xf32>
    %71 = arith.mulf %70, %56 : vector<1x262xf32>
    %72 = arith.addf %69, %71 : vector<1x262xf32>
    %c2 = arith.constant 2 : index
    %73 = memref.load %arg1[%c2] : memref<98xf32, #tpu.memory_space<smem>>
    %c51 = arith.constant 51 : index
    %74 = memref.load %arg1[%c51] : memref<98xf32, #tpu.memory_space<smem>>
    %75 = vector.broadcast %73 : f32 to vector<1x262xf32>
    %76 = arith.mulf %75, %55 : vector<1x262xf32>
    %77 = arith.addf %50, %76 : vector<1x262xf32>
    %78 = vector.broadcast %74 : f32 to vector<1x262xf32>
    %79 = arith.mulf %78, %56 : vector<1x262xf32>
    %80 = arith.addf %77, %79 : vector<1x262xf32>
    %c3 = arith.constant 3 : index
    %81 = memref.load %arg1[%c3] : memref<98xf32, #tpu.memory_space<smem>>
    %c52 = arith.constant 52 : index
    %82 = memref.load %arg1[%c52] : memref<98xf32, #tpu.memory_space<smem>>
    %83 = vector.broadcast %81 : f32 to vector<1x262xf32>
    %84 = arith.mulf %83, %55 : vector<1x262xf32>
    %85 = arith.addf %51, %84 : vector<1x262xf32>
    %86 = vector.broadcast %82 : f32 to vector<1x262xf32>
    %87 = arith.mulf %86, %56 : vector<1x262xf32>
    %88 = arith.addf %85, %87 : vector<1x262xf32>
    %c4 = arith.constant 4 : index
    %89 = memref.load %arg1[%c4] : memref<98xf32, #tpu.memory_space<smem>>
    %c53 = arith.constant 53 : index
    %90 = memref.load %arg1[%c53] : memref<98xf32, #tpu.memory_space<smem>>
    %91 = vector.broadcast %89 : f32 to vector<1x262xf32>
    %92 = arith.mulf %91, %55 : vector<1x262xf32>
    %93 = arith.addf %52, %92 : vector<1x262xf32>
    %94 = vector.broadcast %90 : f32 to vector<1x262xf32>
    %95 = arith.mulf %94, %56 : vector<1x262xf32>
    %96 = arith.addf %93, %95 : vector<1x262xf32>
    %c5 = arith.constant 5 : index
    %97 = memref.load %arg1[%c5] : memref<98xf32, #tpu.memory_space<smem>>
    %c54 = arith.constant 54 : index
    %98 = memref.load %arg1[%c54] : memref<98xf32, #tpu.memory_space<smem>>
    %99 = vector.broadcast %97 : f32 to vector<1x262xf32>
    %100 = arith.mulf %99, %55 : vector<1x262xf32>
    %101 = arith.addf %53, %100 : vector<1x262xf32>
    %102 = vector.broadcast %98 : f32 to vector<1x262xf32>
    %103 = arith.mulf %102, %56 : vector<1x262xf32>
    %104 = arith.addf %101, %103 : vector<1x262xf32>
    %c6 = arith.constant 6 : index
    %105 = memref.load %arg1[%c6] : memref<98xf32, #tpu.memory_space<smem>>
    %c55 = arith.constant 55 : index
    %106 = memref.load %arg1[%c55] : memref<98xf32, #tpu.memory_space<smem>>
    %107 = vector.broadcast %105 : f32 to vector<1x262xf32>
    %108 = arith.mulf %107, %55 : vector<1x262xf32>
    %109 = arith.addf %54, %108 : vector<1x262xf32>
    %110 = vector.broadcast %106 : f32 to vector<1x262xf32>
    %111 = arith.mulf %110, %56 : vector<1x262xf32>
    %112 = arith.addf %109, %111 : vector<1x262xf32>
    %113 = vector.extract_strided_slice %13 {offsets = [0, 16], sizes = [1, 262], strides = [1, 1]} : vector<1x358xf32> to vector<1x262xf32>
    %114 = vector.extract_strided_slice %14 {offsets = [0, 16], sizes = [1, 262], strides = [1, 1]} : vector<1x358xf32> to vector<1x262xf32>
    %c7 = arith.constant 7 : index
    %115 = memref.load %arg1[%c7] : memref<98xf32, #tpu.memory_space<smem>>
    %c56 = arith.constant 56 : index
    %116 = memref.load %arg1[%c56] : memref<98xf32, #tpu.memory_space<smem>>
    %117 = vector.broadcast %115 : f32 to vector<1x262xf32>
    %118 = arith.mulf %117, %113 : vector<1x262xf32>
    %119 = arith.addf %64, %118 : vector<1x262xf32>
    %120 = vector.broadcast %116 : f32 to vector<1x262xf32>
    %121 = arith.mulf %120, %114 : vector<1x262xf32>
    %122 = arith.addf %119, %121 : vector<1x262xf32>
    %c8 = arith.constant 8 : index
    %123 = memref.load %arg1[%c8] : memref<98xf32, #tpu.memory_space<smem>>
    %c57 = arith.constant 57 : index
    %124 = memref.load %arg1[%c57] : memref<98xf32, #tpu.memory_space<smem>>
    %125 = vector.broadcast %123 : f32 to vector<1x262xf32>
    %126 = arith.mulf %125, %113 : vector<1x262xf32>
    %127 = arith.addf %72, %126 : vector<1x262xf32>
    %128 = vector.broadcast %124 : f32 to vector<1x262xf32>
    %129 = arith.mulf %128, %114 : vector<1x262xf32>
    %130 = arith.addf %127, %129 : vector<1x262xf32>
    %c9 = arith.constant 9 : index
    %131 = memref.load %arg1[%c9] : memref<98xf32, #tpu.memory_space<smem>>
    %c58 = arith.constant 58 : index
    %132 = memref.load %arg1[%c58] : memref<98xf32, #tpu.memory_space<smem>>
    %133 = vector.broadcast %131 : f32 to vector<1x262xf32>
    %134 = arith.mulf %133, %113 : vector<1x262xf32>
    %135 = arith.addf %80, %134 : vector<1x262xf32>
    %136 = vector.broadcast %132 : f32 to vector<1x262xf32>
    %137 = arith.mulf %136, %114 : vector<1x262xf32>
    %138 = arith.addf %135, %137 : vector<1x262xf32>
    %c10 = arith.constant 10 : index
    %139 = memref.load %arg1[%c10] : memref<98xf32, #tpu.memory_space<smem>>
    %c59 = arith.constant 59 : index
    %140 = memref.load %arg1[%c59] : memref<98xf32, #tpu.memory_space<smem>>
    %141 = vector.broadcast %139 : f32 to vector<1x262xf32>
    %142 = arith.mulf %141, %113 : vector<1x262xf32>
    %143 = arith.addf %88, %142 : vector<1x262xf32>
    %144 = vector.broadcast %140 : f32 to vector<1x262xf32>
    %145 = arith.mulf %144, %114 : vector<1x262xf32>
    %146 = arith.addf %143, %145 : vector<1x262xf32>
    %c11 = arith.constant 11 : index
    %147 = memref.load %arg1[%c11] : memref<98xf32, #tpu.memory_space<smem>>
    %c60 = arith.constant 60 : index
    %148 = memref.load %arg1[%c60] : memref<98xf32, #tpu.memory_space<smem>>
    %149 = vector.broadcast %147 : f32 to vector<1x262xf32>
    %150 = arith.mulf %149, %113 : vector<1x262xf32>
    %151 = arith.addf %96, %150 : vector<1x262xf32>
    %152 = vector.broadcast %148 : f32 to vector<1x262xf32>
    %153 = arith.mulf %152, %114 : vector<1x262xf32>
    %154 = arith.addf %151, %153 : vector<1x262xf32>
    %c12 = arith.constant 12 : index
    %155 = memref.load %arg1[%c12] : memref<98xf32, #tpu.memory_space<smem>>
    %c61 = arith.constant 61 : index
    %156 = memref.load %arg1[%c61] : memref<98xf32, #tpu.memory_space<smem>>
    %157 = vector.broadcast %155 : f32 to vector<1x262xf32>
    %158 = arith.mulf %157, %113 : vector<1x262xf32>
    %159 = arith.addf %104, %158 : vector<1x262xf32>
    %160 = vector.broadcast %156 : f32 to vector<1x262xf32>
    %161 = arith.mulf %160, %114 : vector<1x262xf32>
    %162 = arith.addf %159, %161 : vector<1x262xf32>
    %c13 = arith.constant 13 : index
    %163 = memref.load %arg1[%c13] : memref<98xf32, #tpu.memory_space<smem>>
    %c62 = arith.constant 62 : index
    %164 = memref.load %arg1[%c62] : memref<98xf32, #tpu.memory_space<smem>>
    %165 = vector.broadcast %163 : f32 to vector<1x262xf32>
    %166 = arith.mulf %165, %113 : vector<1x262xf32>
    %167 = arith.addf %112, %166 : vector<1x262xf32>
    %168 = vector.broadcast %164 : f32 to vector<1x262xf32>
    %169 = arith.mulf %168, %114 : vector<1x262xf32>
    %170 = arith.addf %167, %169 : vector<1x262xf32>
    %171 = vector.extract_strided_slice %13 {offsets = [0, 32], sizes = [1, 262], strides = [1, 1]} : vector<1x358xf32> to vector<1x262xf32>
    %172 = vector.extract_strided_slice %14 {offsets = [0, 32], sizes = [1, 262], strides = [1, 1]} : vector<1x358xf32> to vector<1x262xf32>
    %c14 = arith.constant 14 : index
    %173 = memref.load %arg1[%c14] : memref<98xf32, #tpu.memory_space<smem>>
    %c63 = arith.constant 63 : index
    %174 = memref.load %arg1[%c63] : memref<98xf32, #tpu.memory_space<smem>>
    %175 = vector.broadcast %173 : f32 to vector<1x262xf32>
    %176 = arith.mulf %175, %171 : vector<1x262xf32>
    %177 = arith.addf %122, %176 : vector<1x262xf32>
    %178 = vector.broadcast %174 : f32 to vector<1x262xf32>
    %179 = arith.mulf %178, %172 : vector<1x262xf32>
    %180 = arith.addf %177, %179 : vector<1x262xf32>
    %c15 = arith.constant 15 : index
    %181 = memref.load %arg1[%c15] : memref<98xf32, #tpu.memory_space<smem>>
    %c64 = arith.constant 64 : index
    %182 = memref.load %arg1[%c64] : memref<98xf32, #tpu.memory_space<smem>>
    %183 = vector.broadcast %181 : f32 to vector<1x262xf32>
    %184 = arith.mulf %183, %171 : vector<1x262xf32>
    %185 = arith.addf %130, %184 : vector<1x262xf32>
    %186 = vector.broadcast %182 : f32 to vector<1x262xf32>
    %187 = arith.mulf %186, %172 : vector<1x262xf32>
    %188 = arith.addf %185, %187 : vector<1x262xf32>
    %c16 = arith.constant 16 : index
    %189 = memref.load %arg1[%c16] : memref<98xf32, #tpu.memory_space<smem>>
    %c65 = arith.constant 65 : index
    %190 = memref.load %arg1[%c65] : memref<98xf32, #tpu.memory_space<smem>>
    %191 = vector.broadcast %189 : f32 to vector<1x262xf32>
    %192 = arith.mulf %191, %171 : vector<1x262xf32>
    %193 = arith.addf %138, %192 : vector<1x262xf32>
    %194 = vector.broadcast %190 : f32 to vector<1x262xf32>
    %195 = arith.mulf %194, %172 : vector<1x262xf32>
    %196 = arith.addf %193, %195 : vector<1x262xf32>
    %c17 = arith.constant 17 : index
    %197 = memref.load %arg1[%c17] : memref<98xf32, #tpu.memory_space<smem>>
    %c66 = arith.constant 66 : index
    %198 = memref.load %arg1[%c66] : memref<98xf32, #tpu.memory_space<smem>>
    %199 = vector.broadcast %197 : f32 to vector<1x262xf32>
    %200 = arith.mulf %199, %171 : vector<1x262xf32>
    %201 = arith.addf %146, %200 : vector<1x262xf32>
    %202 = vector.broadcast %198 : f32 to vector<1x262xf32>
    %203 = arith.mulf %202, %172 : vector<1x262xf32>
    %204 = arith.addf %201, %203 : vector<1x262xf32>
    %c18 = arith.constant 18 : index
    %205 = memref.load %arg1[%c18] : memref<98xf32, #tpu.memory_space<smem>>
    %c67 = arith.constant 67 : index
    %206 = memref.load %arg1[%c67] : memref<98xf32, #tpu.memory_space<smem>>
    %207 = vector.broadcast %205 : f32 to vector<1x262xf32>
    %208 = arith.mulf %207, %171 : vector<1x262xf32>
    %209 = arith.addf %154, %208 : vector<1x262xf32>
    %210 = vector.broadcast %206 : f32 to vector<1x262xf32>
    %211 = arith.mulf %210, %172 : vector<1x262xf32>
    %212 = arith.addf %209, %211 : vector<1x262xf32>
    %c19 = arith.constant 19 : index
    %213 = memref.load %arg1[%c19] : memref<98xf32, #tpu.memory_space<smem>>
    %c68 = arith.constant 68 : index
    %214 = memref.load %arg1[%c68] : memref<98xf32, #tpu.memory_space<smem>>
    %215 = vector.broadcast %213 : f32 to vector<1x262xf32>
    %216 = arith.mulf %215, %171 : vector<1x262xf32>
    %217 = arith.addf %162, %216 : vector<1x262xf32>
    %218 = vector.broadcast %214 : f32 to vector<1x262xf32>
    %219 = arith.mulf %218, %172 : vector<1x262xf32>
    %220 = arith.addf %217, %219 : vector<1x262xf32>
    %c20 = arith.constant 20 : index
    %221 = memref.load %arg1[%c20] : memref<98xf32, #tpu.memory_space<smem>>
    %c69 = arith.constant 69 : index
    %222 = memref.load %arg1[%c69] : memref<98xf32, #tpu.memory_space<smem>>
    %223 = vector.broadcast %221 : f32 to vector<1x262xf32>
    %224 = arith.mulf %223, %171 : vector<1x262xf32>
    %225 = arith.addf %170, %224 : vector<1x262xf32>
    %226 = vector.broadcast %222 : f32 to vector<1x262xf32>
    %227 = arith.mulf %226, %172 : vector<1x262xf32>
    %228 = arith.addf %225, %227 : vector<1x262xf32>
    %229 = vector.extract_strided_slice %13 {offsets = [0, 48], sizes = [1, 262], strides = [1, 1]} : vector<1x358xf32> to vector<1x262xf32>
    %230 = vector.extract_strided_slice %14 {offsets = [0, 48], sizes = [1, 262], strides = [1, 1]} : vector<1x358xf32> to vector<1x262xf32>
    %c21 = arith.constant 21 : index
    %231 = memref.load %arg1[%c21] : memref<98xf32, #tpu.memory_space<smem>>
    %c70 = arith.constant 70 : index
    %232 = memref.load %arg1[%c70] : memref<98xf32, #tpu.memory_space<smem>>
    %233 = vector.broadcast %231 : f32 to vector<1x262xf32>
    %234 = arith.mulf %233, %229 : vector<1x262xf32>
    %235 = arith.addf %180, %234 : vector<1x262xf32>
    %236 = vector.broadcast %232 : f32 to vector<1x262xf32>
    %237 = arith.mulf %236, %230 : vector<1x262xf32>
    %238 = arith.addf %235, %237 : vector<1x262xf32>
    %c22 = arith.constant 22 : index
    %239 = memref.load %arg1[%c22] : memref<98xf32, #tpu.memory_space<smem>>
    %c71 = arith.constant 71 : index
    %240 = memref.load %arg1[%c71] : memref<98xf32, #tpu.memory_space<smem>>
    %241 = vector.broadcast %239 : f32 to vector<1x262xf32>
    %242 = arith.mulf %241, %229 : vector<1x262xf32>
    %243 = arith.addf %188, %242 : vector<1x262xf32>
    %244 = vector.broadcast %240 : f32 to vector<1x262xf32>
    %245 = arith.mulf %244, %230 : vector<1x262xf32>
    %246 = arith.addf %243, %245 : vector<1x262xf32>
    %c23 = arith.constant 23 : index
    %247 = memref.load %arg1[%c23] : memref<98xf32, #tpu.memory_space<smem>>
    %c72 = arith.constant 72 : index
    %248 = memref.load %arg1[%c72] : memref<98xf32, #tpu.memory_space<smem>>
    %249 = vector.broadcast %247 : f32 to vector<1x262xf32>
    %250 = arith.mulf %249, %229 : vector<1x262xf32>
    %251 = arith.addf %196, %250 : vector<1x262xf32>
    %252 = vector.broadcast %248 : f32 to vector<1x262xf32>
    %253 = arith.mulf %252, %230 : vector<1x262xf32>
    %254 = arith.addf %251, %253 : vector<1x262xf32>
    %c24 = arith.constant 24 : index
    %255 = memref.load %arg1[%c24] : memref<98xf32, #tpu.memory_space<smem>>
    %c73 = arith.constant 73 : index
    %256 = memref.load %arg1[%c73] : memref<98xf32, #tpu.memory_space<smem>>
    %257 = vector.broadcast %255 : f32 to vector<1x262xf32>
    %258 = arith.mulf %257, %229 : vector<1x262xf32>
    %259 = arith.addf %204, %258 : vector<1x262xf32>
    %260 = vector.broadcast %256 : f32 to vector<1x262xf32>
    %261 = arith.mulf %260, %230 : vector<1x262xf32>
    %262 = arith.addf %259, %261 : vector<1x262xf32>
    %c25 = arith.constant 25 : index
    %263 = memref.load %arg1[%c25] : memref<98xf32, #tpu.memory_space<smem>>
    %c74 = arith.constant 74 : index
    %264 = memref.load %arg1[%c74] : memref<98xf32, #tpu.memory_space<smem>>
    %265 = vector.broadcast %263 : f32 to vector<1x262xf32>
    %266 = arith.mulf %265, %229 : vector<1x262xf32>
    %267 = arith.addf %212, %266 : vector<1x262xf32>
    %268 = vector.broadcast %264 : f32 to vector<1x262xf32>
    %269 = arith.mulf %268, %230 : vector<1x262xf32>
    %270 = arith.addf %267, %269 : vector<1x262xf32>
    %c26 = arith.constant 26 : index
    %271 = memref.load %arg1[%c26] : memref<98xf32, #tpu.memory_space<smem>>
    %c75 = arith.constant 75 : index
    %272 = memref.load %arg1[%c75] : memref<98xf32, #tpu.memory_space<smem>>
    %273 = vector.broadcast %271 : f32 to vector<1x262xf32>
    %274 = arith.mulf %273, %229 : vector<1x262xf32>
    %275 = arith.addf %220, %274 : vector<1x262xf32>
    %276 = vector.broadcast %272 : f32 to vector<1x262xf32>
    %277 = arith.mulf %276, %230 : vector<1x262xf32>
    %278 = arith.addf %275, %277 : vector<1x262xf32>
    %c27 = arith.constant 27 : index
    %279 = memref.load %arg1[%c27] : memref<98xf32, #tpu.memory_space<smem>>
    %c76 = arith.constant 76 : index
    %280 = memref.load %arg1[%c76] : memref<98xf32, #tpu.memory_space<smem>>
    %281 = vector.broadcast %279 : f32 to vector<1x262xf32>
    %282 = arith.mulf %281, %229 : vector<1x262xf32>
    %283 = arith.addf %228, %282 : vector<1x262xf32>
    %284 = vector.broadcast %280 : f32 to vector<1x262xf32>
    %285 = arith.mulf %284, %230 : vector<1x262xf32>
    %286 = arith.addf %283, %285 : vector<1x262xf32>
    %287 = vector.extract_strided_slice %13 {offsets = [0, 64], sizes = [1, 262], strides = [1, 1]} : vector<1x358xf32> to vector<1x262xf32>
    %288 = vector.extract_strided_slice %14 {offsets = [0, 64], sizes = [1, 262], strides = [1, 1]} : vector<1x358xf32> to vector<1x262xf32>
    %c28 = arith.constant 28 : index
    %289 = memref.load %arg1[%c28] : memref<98xf32, #tpu.memory_space<smem>>
    %c77 = arith.constant 77 : index
    %290 = memref.load %arg1[%c77] : memref<98xf32, #tpu.memory_space<smem>>
    %291 = vector.broadcast %289 : f32 to vector<1x262xf32>
    %292 = arith.mulf %291, %287 : vector<1x262xf32>
    %293 = arith.addf %238, %292 : vector<1x262xf32>
    %294 = vector.broadcast %290 : f32 to vector<1x262xf32>
    %295 = arith.mulf %294, %288 : vector<1x262xf32>
    %296 = arith.addf %293, %295 : vector<1x262xf32>
    %c29 = arith.constant 29 : index
    %297 = memref.load %arg1[%c29] : memref<98xf32, #tpu.memory_space<smem>>
    %c78 = arith.constant 78 : index
    %298 = memref.load %arg1[%c78] : memref<98xf32, #tpu.memory_space<smem>>
    %299 = vector.broadcast %297 : f32 to vector<1x262xf32>
    %300 = arith.mulf %299, %287 : vector<1x262xf32>
    %301 = arith.addf %246, %300 : vector<1x262xf32>
    %302 = vector.broadcast %298 : f32 to vector<1x262xf32>
    %303 = arith.mulf %302, %288 : vector<1x262xf32>
    %304 = arith.addf %301, %303 : vector<1x262xf32>
    %c30 = arith.constant 30 : index
    %305 = memref.load %arg1[%c30] : memref<98xf32, #tpu.memory_space<smem>>
    %c79 = arith.constant 79 : index
    %306 = memref.load %arg1[%c79] : memref<98xf32, #tpu.memory_space<smem>>
    %307 = vector.broadcast %305 : f32 to vector<1x262xf32>
    %308 = arith.mulf %307, %287 : vector<1x262xf32>
    %309 = arith.addf %254, %308 : vector<1x262xf32>
    %310 = vector.broadcast %306 : f32 to vector<1x262xf32>
    %311 = arith.mulf %310, %288 : vector<1x262xf32>
    %312 = arith.addf %309, %311 : vector<1x262xf32>
    %c31 = arith.constant 31 : index
    %313 = memref.load %arg1[%c31] : memref<98xf32, #tpu.memory_space<smem>>
    %c80 = arith.constant 80 : index
    %314 = memref.load %arg1[%c80] : memref<98xf32, #tpu.memory_space<smem>>
    %315 = vector.broadcast %313 : f32 to vector<1x262xf32>
    %316 = arith.mulf %315, %287 : vector<1x262xf32>
    %317 = arith.addf %262, %316 : vector<1x262xf32>
    %318 = vector.broadcast %314 : f32 to vector<1x262xf32>
    %319 = arith.mulf %318, %288 : vector<1x262xf32>
    %320 = arith.addf %317, %319 : vector<1x262xf32>
    %c32 = arith.constant 32 : index
    %321 = memref.load %arg1[%c32] : memref<98xf32, #tpu.memory_space<smem>>
    %c81 = arith.constant 81 : index
    %322 = memref.load %arg1[%c81] : memref<98xf32, #tpu.memory_space<smem>>
    %323 = vector.broadcast %321 : f32 to vector<1x262xf32>
    %324 = arith.mulf %323, %287 : vector<1x262xf32>
    %325 = arith.addf %270, %324 : vector<1x262xf32>
    %326 = vector.broadcast %322 : f32 to vector<1x262xf32>
    %327 = arith.mulf %326, %288 : vector<1x262xf32>
    %328 = arith.addf %325, %327 : vector<1x262xf32>
    %c33 = arith.constant 33 : index
    %329 = memref.load %arg1[%c33] : memref<98xf32, #tpu.memory_space<smem>>
    %c82 = arith.constant 82 : index
    %330 = memref.load %arg1[%c82] : memref<98xf32, #tpu.memory_space<smem>>
    %331 = vector.broadcast %329 : f32 to vector<1x262xf32>
    %332 = arith.mulf %331, %287 : vector<1x262xf32>
    %333 = arith.addf %278, %332 : vector<1x262xf32>
    %334 = vector.broadcast %330 : f32 to vector<1x262xf32>
    %335 = arith.mulf %334, %288 : vector<1x262xf32>
    %336 = arith.addf %333, %335 : vector<1x262xf32>
    %c34 = arith.constant 34 : index
    %337 = memref.load %arg1[%c34] : memref<98xf32, #tpu.memory_space<smem>>
    %c83 = arith.constant 83 : index
    %338 = memref.load %arg1[%c83] : memref<98xf32, #tpu.memory_space<smem>>
    %339 = vector.broadcast %337 : f32 to vector<1x262xf32>
    %340 = arith.mulf %339, %287 : vector<1x262xf32>
    %341 = arith.addf %286, %340 : vector<1x262xf32>
    %342 = vector.broadcast %338 : f32 to vector<1x262xf32>
    %343 = arith.mulf %342, %288 : vector<1x262xf32>
    %344 = arith.addf %341, %343 : vector<1x262xf32>
    %345 = vector.extract_strided_slice %13 {offsets = [0, 80], sizes = [1, 262], strides = [1, 1]} : vector<1x358xf32> to vector<1x262xf32>
    %346 = vector.extract_strided_slice %14 {offsets = [0, 80], sizes = [1, 262], strides = [1, 1]} : vector<1x358xf32> to vector<1x262xf32>
    %c35 = arith.constant 35 : index
    %347 = memref.load %arg1[%c35] : memref<98xf32, #tpu.memory_space<smem>>
    %c84 = arith.constant 84 : index
    %348 = memref.load %arg1[%c84] : memref<98xf32, #tpu.memory_space<smem>>
    %349 = vector.broadcast %347 : f32 to vector<1x262xf32>
    %350 = arith.mulf %349, %345 : vector<1x262xf32>
    %351 = arith.addf %296, %350 : vector<1x262xf32>
    %352 = vector.broadcast %348 : f32 to vector<1x262xf32>
    %353 = arith.mulf %352, %346 : vector<1x262xf32>
    %354 = arith.addf %351, %353 : vector<1x262xf32>
    %c36 = arith.constant 36 : index
    %355 = memref.load %arg1[%c36] : memref<98xf32, #tpu.memory_space<smem>>
    %c85 = arith.constant 85 : index
    %356 = memref.load %arg1[%c85] : memref<98xf32, #tpu.memory_space<smem>>
    %357 = vector.broadcast %355 : f32 to vector<1x262xf32>
    %358 = arith.mulf %357, %345 : vector<1x262xf32>
    %359 = arith.addf %304, %358 : vector<1x262xf32>
    %360 = vector.broadcast %356 : f32 to vector<1x262xf32>
    %361 = arith.mulf %360, %346 : vector<1x262xf32>
    %362 = arith.addf %359, %361 : vector<1x262xf32>
    %c37 = arith.constant 37 : index
    %363 = memref.load %arg1[%c37] : memref<98xf32, #tpu.memory_space<smem>>
    %c86 = arith.constant 86 : index
    %364 = memref.load %arg1[%c86] : memref<98xf32, #tpu.memory_space<smem>>
    %365 = vector.broadcast %363 : f32 to vector<1x262xf32>
    %366 = arith.mulf %365, %345 : vector<1x262xf32>
    %367 = arith.addf %312, %366 : vector<1x262xf32>
    %368 = vector.broadcast %364 : f32 to vector<1x262xf32>
    %369 = arith.mulf %368, %346 : vector<1x262xf32>
    %370 = arith.addf %367, %369 : vector<1x262xf32>
    %c38 = arith.constant 38 : index
    %371 = memref.load %arg1[%c38] : memref<98xf32, #tpu.memory_space<smem>>
    %c87 = arith.constant 87 : index
    %372 = memref.load %arg1[%c87] : memref<98xf32, #tpu.memory_space<smem>>
    %373 = vector.broadcast %371 : f32 to vector<1x262xf32>
    %374 = arith.mulf %373, %345 : vector<1x262xf32>
    %375 = arith.addf %320, %374 : vector<1x262xf32>
    %376 = vector.broadcast %372 : f32 to vector<1x262xf32>
    %377 = arith.mulf %376, %346 : vector<1x262xf32>
    %378 = arith.addf %375, %377 : vector<1x262xf32>
    %c39 = arith.constant 39 : index
    %379 = memref.load %arg1[%c39] : memref<98xf32, #tpu.memory_space<smem>>
    %c88 = arith.constant 88 : index
    %380 = memref.load %arg1[%c88] : memref<98xf32, #tpu.memory_space<smem>>
    %381 = vector.broadcast %379 : f32 to vector<1x262xf32>
    %382 = arith.mulf %381, %345 : vector<1x262xf32>
    %383 = arith.addf %328, %382 : vector<1x262xf32>
    %384 = vector.broadcast %380 : f32 to vector<1x262xf32>
    %385 = arith.mulf %384, %346 : vector<1x262xf32>
    %386 = arith.addf %383, %385 : vector<1x262xf32>
    %c40 = arith.constant 40 : index
    %387 = memref.load %arg1[%c40] : memref<98xf32, #tpu.memory_space<smem>>
    %c89 = arith.constant 89 : index
    %388 = memref.load %arg1[%c89] : memref<98xf32, #tpu.memory_space<smem>>
    %389 = vector.broadcast %387 : f32 to vector<1x262xf32>
    %390 = arith.mulf %389, %345 : vector<1x262xf32>
    %391 = arith.addf %336, %390 : vector<1x262xf32>
    %392 = vector.broadcast %388 : f32 to vector<1x262xf32>
    %393 = arith.mulf %392, %346 : vector<1x262xf32>
    %394 = arith.addf %391, %393 : vector<1x262xf32>
    %c41 = arith.constant 41 : index
    %395 = memref.load %arg1[%c41] : memref<98xf32, #tpu.memory_space<smem>>
    %c90 = arith.constant 90 : index
    %396 = memref.load %arg1[%c90] : memref<98xf32, #tpu.memory_space<smem>>
    %397 = vector.broadcast %395 : f32 to vector<1x262xf32>
    %398 = arith.mulf %397, %345 : vector<1x262xf32>
    %399 = arith.addf %344, %398 : vector<1x262xf32>
    %400 = vector.broadcast %396 : f32 to vector<1x262xf32>
    %401 = arith.mulf %400, %346 : vector<1x262xf32>
    %402 = arith.addf %399, %401 : vector<1x262xf32>
    %403 = vector.extract_strided_slice %13 {offsets = [0, 96], sizes = [1, 262], strides = [1, 1]} : vector<1x358xf32> to vector<1x262xf32>
    %404 = vector.extract_strided_slice %14 {offsets = [0, 96], sizes = [1, 262], strides = [1, 1]} : vector<1x358xf32> to vector<1x262xf32>
    %c42 = arith.constant 42 : index
    %405 = memref.load %arg1[%c42] : memref<98xf32, #tpu.memory_space<smem>>
    %c91 = arith.constant 91 : index
    %406 = memref.load %arg1[%c91] : memref<98xf32, #tpu.memory_space<smem>>
    %407 = vector.broadcast %405 : f32 to vector<1x262xf32>
    %408 = arith.mulf %407, %403 : vector<1x262xf32>
    %409 = arith.addf %354, %408 : vector<1x262xf32>
    %410 = vector.broadcast %406 : f32 to vector<1x262xf32>
    %411 = arith.mulf %410, %404 : vector<1x262xf32>
    %412 = arith.addf %409, %411 : vector<1x262xf32>
    %c43 = arith.constant 43 : index
    %413 = memref.load %arg1[%c43] : memref<98xf32, #tpu.memory_space<smem>>
    %c92 = arith.constant 92 : index
    %414 = memref.load %arg1[%c92] : memref<98xf32, #tpu.memory_space<smem>>
    %415 = vector.broadcast %413 : f32 to vector<1x262xf32>
    %416 = arith.mulf %415, %403 : vector<1x262xf32>
    %417 = arith.addf %362, %416 : vector<1x262xf32>
    %418 = vector.broadcast %414 : f32 to vector<1x262xf32>
    %419 = arith.mulf %418, %404 : vector<1x262xf32>
    %420 = arith.addf %417, %419 : vector<1x262xf32>
    %c44 = arith.constant 44 : index
    %421 = memref.load %arg1[%c44] : memref<98xf32, #tpu.memory_space<smem>>
    %c93 = arith.constant 93 : index
    %422 = memref.load %arg1[%c93] : memref<98xf32, #tpu.memory_space<smem>>
    %423 = vector.broadcast %421 : f32 to vector<1x262xf32>
    %424 = arith.mulf %423, %403 : vector<1x262xf32>
    %425 = arith.addf %370, %424 : vector<1x262xf32>
    %426 = vector.broadcast %422 : f32 to vector<1x262xf32>
    %427 = arith.mulf %426, %404 : vector<1x262xf32>
    %428 = arith.addf %425, %427 : vector<1x262xf32>
    %c45 = arith.constant 45 : index
    %429 = memref.load %arg1[%c45] : memref<98xf32, #tpu.memory_space<smem>>
    %c94 = arith.constant 94 : index
    %430 = memref.load %arg1[%c94] : memref<98xf32, #tpu.memory_space<smem>>
    %431 = vector.broadcast %429 : f32 to vector<1x262xf32>
    %432 = arith.mulf %431, %403 : vector<1x262xf32>
    %433 = arith.addf %378, %432 : vector<1x262xf32>
    %434 = vector.broadcast %430 : f32 to vector<1x262xf32>
    %435 = arith.mulf %434, %404 : vector<1x262xf32>
    %436 = arith.addf %433, %435 : vector<1x262xf32>
    %c46 = arith.constant 46 : index
    %437 = memref.load %arg1[%c46] : memref<98xf32, #tpu.memory_space<smem>>
    %c95 = arith.constant 95 : index
    %438 = memref.load %arg1[%c95] : memref<98xf32, #tpu.memory_space<smem>>
    %439 = vector.broadcast %437 : f32 to vector<1x262xf32>
    %440 = arith.mulf %439, %403 : vector<1x262xf32>
    %441 = arith.addf %386, %440 : vector<1x262xf32>
    %442 = vector.broadcast %438 : f32 to vector<1x262xf32>
    %443 = arith.mulf %442, %404 : vector<1x262xf32>
    %444 = arith.addf %441, %443 : vector<1x262xf32>
    %c47 = arith.constant 47 : index
    %445 = memref.load %arg1[%c47] : memref<98xf32, #tpu.memory_space<smem>>
    %c96 = arith.constant 96 : index
    %446 = memref.load %arg1[%c96] : memref<98xf32, #tpu.memory_space<smem>>
    %447 = vector.broadcast %445 : f32 to vector<1x262xf32>
    %448 = arith.mulf %447, %403 : vector<1x262xf32>
    %449 = arith.addf %394, %448 : vector<1x262xf32>
    %450 = vector.broadcast %446 : f32 to vector<1x262xf32>
    %451 = arith.mulf %450, %404 : vector<1x262xf32>
    %452 = arith.addf %449, %451 : vector<1x262xf32>
    %c48 = arith.constant 48 : index
    %453 = memref.load %arg1[%c48] : memref<98xf32, #tpu.memory_space<smem>>
    %c97 = arith.constant 97 : index
    %454 = memref.load %arg1[%c97] : memref<98xf32, #tpu.memory_space<smem>>
    %455 = vector.broadcast %453 : f32 to vector<1x262xf32>
    %456 = arith.mulf %455, %403 : vector<1x262xf32>
    %457 = arith.addf %402, %456 : vector<1x262xf32>
    %458 = vector.broadcast %454 : f32 to vector<1x262xf32>
    %459 = arith.mulf %458, %404 : vector<1x262xf32>
    %460 = arith.addf %457, %459 : vector<1x262xf32>
    %cst_16 = arith.constant 0.000000e+00 : f32
    %461 = vector.broadcast %cst_16 : f32 to vector<1x256xf32>
    %462 = vector.extract_strided_slice %412 {offsets = [0, 0], sizes = [1, 256], strides = [1, 1]} : vector<1x262xf32> to vector<1x256xf32>
    %cst_17 = arith.constant 0.000000e+00 : f32
    %463 = vector.broadcast %cst_17 : f32 to vector<1x256xf32>
    %464 = arith.select %22, %462, %463 : vector<1x256xi1>, vector<1x256xf32>
    %465 = arith.addf %461, %464 : vector<1x256xf32>
    %466 = vector.extract_strided_slice %420 {offsets = [0, 1], sizes = [1, 256], strides = [1, 1]} : vector<1x262xf32> to vector<1x256xf32>
    %cst_18 = arith.constant 0.000000e+00 : f32
    %467 = vector.broadcast %cst_18 : f32 to vector<1x256xf32>
    %468 = arith.select %27, %466, %467 : vector<1x256xi1>, vector<1x256xf32>
    %469 = arith.addf %465, %468 : vector<1x256xf32>
    %470 = vector.extract_strided_slice %428 {offsets = [0, 2], sizes = [1, 256], strides = [1, 1]} : vector<1x262xf32> to vector<1x256xf32>
    %cst_19 = arith.constant 0.000000e+00 : f32
    %471 = vector.broadcast %cst_19 : f32 to vector<1x256xf32>
    %472 = arith.select %32, %470, %471 : vector<1x256xi1>, vector<1x256xf32>
    %473 = arith.addf %469, %472 : vector<1x256xf32>
    %474 = vector.extract_strided_slice %436 {offsets = [0, 3], sizes = [1, 256], strides = [1, 1]} : vector<1x262xf32> to vector<1x256xf32>
    %475 = arith.addf %473, %474 : vector<1x256xf32>
    %476 = vector.extract_strided_slice %444 {offsets = [0, 4], sizes = [1, 256], strides = [1, 1]} : vector<1x262xf32> to vector<1x256xf32>
    %cst_20 = arith.constant 0.000000e+00 : f32
    %477 = vector.broadcast %cst_20 : f32 to vector<1x256xf32>
    %478 = arith.select %37, %476, %477 : vector<1x256xi1>, vector<1x256xf32>
    %479 = arith.addf %475, %478 : vector<1x256xf32>
    %480 = vector.extract_strided_slice %452 {offsets = [0, 5], sizes = [1, 256], strides = [1, 1]} : vector<1x262xf32> to vector<1x256xf32>
    %cst_21 = arith.constant 0.000000e+00 : f32
    %481 = vector.broadcast %cst_21 : f32 to vector<1x256xf32>
    %482 = arith.select %42, %480, %481 : vector<1x256xi1>, vector<1x256xf32>
    %483 = arith.addf %479, %482 : vector<1x256xf32>
    %484 = vector.extract_strided_slice %460 {offsets = [0, 6], sizes = [1, 256], strides = [1, 1]} : vector<1x262xf32> to vector<1x256xf32>
    %cst_22 = arith.constant 0.000000e+00 : f32
    %485 = vector.broadcast %cst_22 : f32 to vector<1x256xf32>
    %486 = arith.select %47, %484, %485 : vector<1x256xi1>, vector<1x256xf32>
    %487 = arith.addf %483, %486 : vector<1x256xf32>
    %488 = arith.negf %487 : vector<1x256xf32>
    %489 = math.exp %488 : vector<1x256xf32>
    %cst_23 = arith.constant 1.000000e+00 : f32
    %490 = vector.broadcast %cst_23 : f32 to vector<1x256xf32>
    %491 = arith.addf %490, %489 : vector<1x256xf32>
    %492 = arith.divf %490, %491 : vector<1x256xf32>
    %493 = vector.shape_cast %492 : vector<1x256xf32> to vector<1x1x256xf32>
    %494 = vector.shape_cast %493 : vector<1x1x256xf32> to vector<1x1x256xf32>
    %495 = vector.broadcast %494 : vector<1x1x256xf32> to vector<1x4x256xf32>
    %c0_i32_24 = arith.constant 0 : i32
    %c1_i32_25 = arith.constant 1 : i32
    %496 = arith.muli %c0_i32_24, %c1_i32_25 : i32
    %c0_i32_26 = arith.constant 0 : i32
    %497 = arith.addi %c0_i32_26, %496 : i32
    %c4_i32_27 = arith.constant 4 : i32
    %498 = arith.muli %497, %c4_i32_27 : i32
    %499 = tpu.assume_multiple %498, 4 : i32
    %c0_28 = arith.constant 0 : index
    %500 = arith.index_cast %499 : i32 to index
    %c0_29 = arith.constant 0 : index
    %501 = vector.load %arg2[%c0_28, %500, %c0_29] : memref<1x4x256xf32, #tpu.memory_space<vmem>>, vector<1x4x256xf32>
    %502 = arith.mulf %501, %495 : vector<1x4x256xf32>
    %c0_30 = arith.constant 0 : index
    %503 = arith.index_cast %499 : i32 to index
    %c0_31 = arith.constant 0 : index
    %504 = vector.load %arg3[%c0_30, %503, %c0_31] : memref<1x4x256xf32, #tpu.memory_space<vmem>>, vector<1x4x256xf32>
    tpu.vector_store %arg3[%c0_30, %503, %c0_31], %502 {strides = array<i32>} : memref<1x4x256xf32, #tpu.memory_space<vmem>>, vector<1x4x256xf32>,
    %c1_i32_32 = arith.constant 1 : i32
    return
  }
  func.func @transform_0(%arg0: i32) -> i32 {
    %c0_i32 = arith.constant 0 : i32
    %c0_i32_0 = arith.constant 0 : i32
    return %c0_i32 : i32
  }
  func.func @transform_1(%arg0: i32) -> (i32, i32, i32) {
    %c0_i32 = arith.constant 0 : i32
    %c0_i32_0 = arith.constant 0 : i32
    %c0_i32_1 = arith.constant 0 : i32
    return %arg0, %c0_i32, %c0_i32_0 : i32, i32, i32
  }
  func.func @transform_2(%arg0: i32) -> (i32, i32, i32) {
    %c0_i32 = arith.constant 0 : i32
    %c0_i32_0 = arith.constant 0 : i32
    %c0_i32_1 = arith.constant 0 : i32
    return %arg0, %c0_i32, %c0_i32_0 : i32, i32, i32
  }
}

</mosaic_0001>

<llo_original>
// kernel: tpu_custom_call.1
$region0: #{tpu_custom_call.1}
  #allocation0 [shape = 'u32[]', space=smem, size = 0x4, offset = 0x4, fixed_abs, tag = 'smem constant byte address 0x4 - core index']
  #allocation1 [shape = 'u32[144,128]{1,0:T(1,128)}', space=vmem, size = 0x12000, scoped, tag = 'internal scratch']
  %s0 = inlined_call_operand.hbm [shape: f32[98], index: 0, kind: input, shape index: {}]
  %s1 = inlined_call_operand.hbm [shape: f32[2,4,256], index: 1, kind: input, shape index: {}]
  %s2 = inlined_call_operand.hbm [shape: f32[2,4,256], index: 2, kind: output, shape index: {}]
  %s3 = sld [smem:[#allocation0]]
  $region49: #{tpu_custom_call.1} parent=0
    _
  %s5 = ssub.s32 1, %s3
  %s6 = scalar_select 0, %s5, %s3
  $region1: #{tpu_custom_call.1} parent=0
    #allocation2 [shape = 'u8[512]{0}', space=smem, size = 0x200, scoped, tag = 'input window, operand 0, single buffered']
    #allocation3 [shape = 's32[2]{0}', space=sflag, size = 0x8, scoped, tag = 'scoped memory for tpu_custom_call.1']
    #allocation4 [shape = 's32[2]{0}', space=sflag, size = 0x8, scoped, tag = 'scoped memory for tpu_custom_call.1']
    #allocation5 [shape = 's32[2]{0}', space=sflag, size = 0x8, scoped, tag = 'scoped memory for tpu_custom_call.1']
    #allocation6 [shape = 'u8[8192]{0}', space=vmem, size = 0x2000, scoped, tag = 'input window, operand 1']
    #allocation7 [shape = 'u8[8192]{0}', space=vmem, size = 0x2000, scoped, tag = 'output window, operand 0']
    %7 = vsyncpa [#allocation5], 0
    %8 = vsyncpa [#allocation3], 0
    %s9 = scalar_lea.sflag [#allocation3], 1
    %10 = vsyncpa %s9, 0
    %11 = vsyncpa [#allocation4], 0
    %s12 = scalar_lea.sflag [#allocation4], 1
    %13 = vsyncpa %s12, 0
    loop: start=0, step=1, limit=4
    $region2: #{tpu_custom_call.1} parent=1 // loop_pre_header
      _
    $region3: #{tpu_custom_call.1} parent=1 // loop_header
      %s15 = sphi 0, %s19
      %p16 = scmp.ge.s32.totalorder %s15, 4
      %s23 = sphi 0, %s23
      %s25 = sphi 0, %s23
      %s26 = sphi 0, %s25
      %s40 = sphi 0, %s26
      %s46 = sphi 0, %s48
      %s49 = sphi 0, %s46
      %s50 = sphi 0, %s49
      %s66 = sphi 0, %s50
      %s72 = sphi 0, %s74
      %s75 = sphi 0, %s72
      %s76 = sphi 0, %s75
      %s92 = sphi 0, %s76
    $region4: #{tpu_custom_call.1} parent=1 // loop_header_branch
      %18 = sbr.rel (%p16) target = $region8
    $region5: #{tpu_custom_call.1} parent=1 // loop_body
      %s20 = ssub.s32 %s15, 1
      %s21 = ssub.s32 %s15, 2
      %s22 = sadd.s32 %s15, 1
      %s24 = sadd.s32 %s23, 1
      %p27 = scmp.eq.s32.totalorder %s15, 1
      %p28 = scmp.ne.s32.totalorder %s23, %s25
      %p29 = scmp.eq.s32.totalorder %s15, 0
      %p30 = por %p28, %p29
      %p31 = scmp.ne.s32.totalorder %s23, %s25
      %p32 = scmp.eq.s32.totalorder %s20, 1
      %p33 = por %p31, %p32
      %p34 = scmp.ne.s32.totalorder %s25, %s26
      %p35 = scmp.eq.s32.totalorder %s20, 0
      %p36 = por %p34, %p35
      %p37 = scmp.ne.s32.totalorder %s25, %s26
      %p38 = scmp.eq.s32.totalorder %s21, 1
      %p39 = por %p37, %p38
      %p41 = scmp.ne.s32.totalorder %s26, %s40
      %p42 = scmp.eq.s32.totalorder %s21, 0
      %p43 = por %p41, %p42
      %s44 = ssub.s32 %s15, %s22
      %p45 = scmp.eq.s32.totalorder %s44, 0
      %s47 = sadd.s32 %s46, 1
      %s48 = scalar_select %p45, %s46, %s47
      %p51 = pneg %p45
      %p52 = scmp.eq.s32.totalorder %s15, 1
      %p53 = por %p51, %p52
      %p54 = scmp.ne.s32.totalorder %s46, %s49
      %p55 = scmp.eq.s32.totalorder %s15, 0
      %p56 = por %p54, %p55
      %p57 = scmp.ne.s32.totalorder %s46, %s49
      %p58 = scmp.eq.s32.totalorder %s20, 1
      %p59 = por %p57, %p58
      %p60 = scmp.ne.s32.totalorder %s49, %s50
      %p61 = scmp.eq.s32.totalorder %s20, 0
      %p62 = por %p60, %p61
      %p63 = scmp.ne.s32.totalorder %s49, %s50
      %p64 = scmp.eq.s32.totalorder %s21, 1
      %p65 = por %p63, %p64
      %p67 = scmp.ne.s32.totalorder %s50, %s66
      %p68 = scmp.eq.s32.totalorder %s21, 0
      %p69 = por %p67, %p68
      %s70 = ssub.s32 %s15, %s22
      %p71 = scmp.eq.s32.totalorder %s70, 0
      %s73 = sadd.s32 %s72, 1
      %s74 = scalar_select %p71, %s72, %s73
      %p77 = pneg %p71
      %p78 = scmp.eq.s32.totalorder %s15, 1
      %p79 = por %p77, %p78
      %p80 = scmp.ne.s32.totalorder %s72, %s75
      %p81 = scmp.eq.s32.totalorder %s15, 0
      %p82 = por %p80, %p81
      %p83 = scmp.ne.s32.totalorder %s72, %s75
      %p84 = scmp.eq.s32.totalorder %s20, 1
      %p85 = por %p83, %p84
      %p86 = scmp.ne.s32.totalorder %s75, %s76
      %p87 = scmp.eq.s32.totalorder %s20, 0
      %p88 = por %p86, %p87
      %p89 = scmp.ne.s32.totalorder %s75, %s76
      %p90 = scmp.eq.s32.totalorder %s21, 1
      %p91 = por %p89, %p90
      %p93 = scmp.ne.s32.totalorder %s76, %s92
      %p94 = scmp.eq.s32.totalorder %s21, 0
      %p95 = por %p93, %p94
      %p96 = scmp.le.s32.totalorder 1, %s15
      %p97 = scmp.lt.s32.totalorder %s15, 3
      %p98 = pnand %p96, %p97
      %p99 = pneg %p98
      // Predicated region
      $region9: #{tpu_custom_call.1} parent=5 // pred_check
        _
      $region10: #{tpu_custom_call.1} parent=5 // pred_check_branch
        %101 = sbr.rel (%p98) target = $region12
      $region11: #{tpu_custom_call.1} parent=5 // pred_region
        %s102 = ssub.s32 %s15, 1
        // Predicated region
        $region13: #{tpu_custom_call.1} parent=11 // pred_check
          %p103 = pneg %p36
        $region14: #{tpu_custom_call.1} parent=11 // pred_check_branch
          %105 = sbr.rel (%p103) target = $region16
        $region15: #{tpu_custom_call.1} parent=11 // pred_region
          %s107 = ssub.s32 16, 16
          %108 = vsyncadd [#allocation5], %s107
          %111 = dma.hbm_to_smem %s0, 16, [#allocation2], [#allocation5]
        $region16: #{tpu_custom_call.1} parent=11 // pred_fallthru
          _
      $region12: #{tpu_custom_call.1} parent=5 // pred_fallthru
        _
      %p112 = scmp.lt.s32.totalorder %s15, 2
      // Predicated region
      $region17: #{tpu_custom_call.1} parent=5 // pred_check
        %p113 = pneg %p112
      $region18: #{tpu_custom_call.1} parent=5 // pred_check_branch
        %115 = sbr.rel (%p113) target = $region20
      $region19: #{tpu_custom_call.1} parent=5 // pred_region
        // Predicated region
        $region21: #{tpu_custom_call.1} parent=19 // pred_check
          %p116 = pneg %p56
        $region22: #{tpu_custom_call.1} parent=19 // pred_check_branch
          %118 = sbr.rel (%p116) target = $region24
        $region23: #{tpu_custom_call.1} parent=19 // pred_region
          %s119 = sand.u32 %s46, 1
          %s120 = scalar_lea.sflag [#allocation3], %s119
          %s121 = sand.u32 %s46, 1
          %s122 = smul.addr %s121, 8
          %s123 = scalar_lea.vmem [#allocation6], %s122
          %s125 = ssub.s32 128, 128
          %126 = vsyncadd %s120, %s125
          %s127 = smul.addr %s15, 2
          %s128 = smul.addr %s127, 64
          %s129 = scalar_lea.hbm %s1, %s128
          %s131 = sshll.u32 %s123, 4
          %s132 = int_to_ptr.vmem [resolvable:$true] %s131
          %134 = dma.hbm_to_vmem [thread:$0]  %s129, 128, %s132, %s120
        $region24: #{tpu_custom_call.1} parent=19 // pred_fallthru
          _
      $region20: #{tpu_custom_call.1} parent=5 // pred_fallthru
        _
      %p135 = scmp.le.s32.totalorder 1, %s15
      %p136 = scmp.lt.s32.totalorder %s15, 3
      %p137 = pnand %p135, %p136
      %p138 = pneg %p137
      // Predicated region
      $region25: #{tpu_custom_call.1} parent=5 // pred_check
        _
      $region26: #{tpu_custom_call.1} parent=5 // pred_check_branch
        %140 = sbr.rel (%p137) target = $region28
      $region27: #{tpu_custom_call.1} parent=5 // pred_region
        %s141 = ssub.s32 %s15, 1
        // Predicated region
        $region29: #{tpu_custom_call.1} parent=27 // pred_check
          %p142 = pneg %p36
        $region30: #{tpu_custom_call.1} parent=27 // pred_check_branch
          %144 = sbr.rel (%p142) target = $region32
        $region31: #{tpu_custom_call.1} parent=27 // pred_region
          %145 = dma.done [#allocation5], 16
        $region32: #{tpu_custom_call.1} parent=27 // pred_fallthru
          _
        %s146 = sand.u32 %s49, 1
        %s147 = scalar_lea.sflag [#allocation3], %s146
        %s148 = sand.u32 %s49, 1
        %s149 = smul.addr %s148, 8
        %s150 = scalar_lea.vmem [#allocation6], %s149
        // Predicated region
        $region33: #{tpu_custom_call.1} parent=27 // pred_check
          %p151 = pneg %p62
        $region34: #{tpu_custom_call.1} parent=27 // pred_check_branch
          %153 = sbr.rel (%p151) target = $region36
        $region35: #{tpu_custom_call.1} parent=27 // pred_region
          %154 = dma.done %s147, 128
        $region36: #{tpu_custom_call.1} parent=27 // pred_fallthru
          _
        %155 = sfence
        %p156 = pneg %p36
        %p157 = pneg %p33
        %s158 = sand.u32 %s49, 1
        %s159 = scalar_lea.sflag [#allocation3], %s158
        %s160 = sand.u32 %s49, 1
        %s161 = smul.addr %s160, 8
        %s162 = scalar_lea.vmem [#allocation6], %s161
        %p163 = pneg %p62
        %p164 = pneg %p59
        %p165 = pneg %p88
        %p166 = pneg %p85
        %s167 = sand.u32 %s75, 1
        %s168 = scalar_lea.sflag [#allocation4], %s167
        %s169 = sand.u32 %s75, 1
        %s170 = smul.addr %s169, 8
        %s171 = scalar_lea.vmem [#allocation7], %s170
        %s172 = smul.u32 0, 2
        %s173 = smul.addr %s172, 4
        %s174 = scalar_lea.vmem %s150, %s173 [#allocation6]
        %v175 = vld [vmem:[%s174] sm:$0xff]
        %v176 = vadd.f32 %v175, 0.0
        %v178 = vcombine.high %v176, %v176
        %vm180 = vcmask 1043456
        %v181 = vsel %vm180, %v176, 0.0
        %v182 = vrot.slane %v181, 4
        %v183 = vadd.f32 %v181, %v182
        %v184 = vrot.slane %v183, 2
        %v185 = vadd.f32 %v183, %v184
        %v186 = vrot.slane %v185, 1
        %v187 = vadd.f32 %v185, %v186
        %v188 = vsel %vm180, %v178, 0.0
        %v189 = vrot.slane %v188, 4
        %v190 = vadd.f32 %v188, %v189
        %v191 = vrot.slane %v190, 2
        %v192 = vadd.f32 %v190, %v191
        %v193 = vrot.slane %v192, 1
        %v194 = vadd.f32 %v192, %v193
        %v196 = vcombine.high %v175, %v175
        %v198 = vsel %vm180, %v175, -inf
        %v199 = vrot.slane %v198, 4
        %v200 = vmax.f32 %v198, %v199
        %v201 = vrot.slane %v200, 2
        %v202 = vmax.f32 %v200, %v201
        %v203 = vrot.slane %v202, 1
        %v204 = vmax.f32 %v202, %v203
        %v205 = vsel %vm180, %v196, -inf
        %v206 = vrot.slane %v205, 4
        %v207 = vmax.f32 %v205, %v206
        %v208 = vrot.slane %v207, 2
        %v209 = vmax.f32 %v207, %v208
        %v210 = vrot.slane %v209, 1
        %v211 = vmax.f32 %v209, %v210
        %v212 = vmul.f32 %v187, 0.25
        %v213 = vmul.f32 %v194, 0.25
        %216 = vrot.lane.b32.xlu0 %v212, 51
        %v217 = vpop.permute.xlu0 %216
        %218 = vrot.lane.b32.xlu0 %v213, 51
        %v219 = vpop.permute.xlu0 %218
        %vm220 = vcmask 416768
        %v221 = vsel %vm220, %v217, %v219
        %v225 = vsel %vm220, 0.0, %v217
        %v226 = vsel %vm220, %v219, 0.0
        %229 = vrot.lane.b32.xlu0 %v204, 51
        %v230 = vpop.permute.xlu0 %229
        %231 = vrot.lane.b32.xlu0 %v211, 51
        %v232 = vpop.permute.xlu0 %231
        %v233 = vsel %vm220, %v230, %v232
        %v237 = vsel %vm220, 0.0, %v230
        %v238 = vsel %vm220, %v232, 0.0
        %v239 = vlaneseq
        %v240 = vand.u32 %v239, 127
        %v241 = vadd.s32 %v240, 128
        %v242 = vand.u32 %v240, 15
        %v243 = vand.u32 %v241, 15
        %vm244 = vcmp.ge.s32.totalorder %v242, 3
        %vm245 = vcmp.ge.s32.totalorder %v243, 3
        %vm246 = vcmp.lt.s32.totalorder %v242, 19
        %vm247 = vcmp.lt.s32.totalorder %v243, 19
        %vm248 = vmand %vm244, %vm246
        %vm249 = vmand %vm245, %vm247
        %vm250 = vcmp.ge.s32.totalorder %v242, 2
        %vm251 = vcmp.ge.s32.totalorder %v243, 2
        %vm252 = vcmp.lt.s32.totalorder %v242, 18
        %vm253 = vcmp.lt.s32.totalorder %v243, 18
        %vm254 = vmand %vm250, %vm252
        %vm255 = vmand %vm251, %vm253
        %vm256 = vcmp.ge.s32.totalorder %v242, 1
        %vm257 = vcmp.ge.s32.totalorder %v243, 1
        %vm258 = vcmp.lt.s32.totalorder %v242, 17
        %vm259 = vcmp.lt.s32.totalorder %v243, 17
        %vm260 = vmand %vm256, %vm258
        %vm261 = vmand %vm257, %vm259
        %vm262 = vcmp.ge.s32.totalorder %v242, 4294967295
        %vm263 = vcmp.ge.s32.totalorder %v243, 4294967295
        %vm264 = vcmp.lt.s32.totalorder %v242, 15
        %vm265 = vcmp.lt.s32.totalorder %v243, 15
        %vm266 = vmand %vm262, %vm264
        %vm267 = vmand %vm263, %vm265
        %vm268 = vcmp.ge.s32.totalorder %v242, 4294967294
        %vm269 = vcmp.ge.s32.totalorder %v243, 4294967294
        %vm270 = vcmp.lt.s32.totalorder %v242, 14
        %vm271 = vcmp.lt.s32.totalorder %v243, 14
        %vm272 = vmand %vm268, %vm270
        %vm273 = vmand %vm269, %vm271
        %vm274 = vcmp.ge.s32.totalorder %v242, 4294967293
        %vm275 = vcmp.ge.s32.totalorder %v243, 4294967293
        %vm276 = vcmp.lt.s32.totalorder %v242, 13
        %vm277 = vcmp.lt.s32.totalorder %v243, 13
        %vm278 = vmand %vm274, %vm276
        %vm279 = vmand %vm275, %vm277
        %s280 = sld [smem:[#allocation2]]
        %s281 = sld [smem:[#allocation2 + $0x31]]
        %v282 = vstv %s280
        %v283 = vmul.f32 %v282, %v225
        %v284 = vmul.f32 %v282, %v221
        %v285 = vadd.f32 %v283, 0.0
        %v286 = vadd.f32 %v284, 0.0
        %v287 = vstv %s281
        %v288 = vmul.f32 %v287, %v237
        %v289 = vmul.f32 %v287, %v233
        %v290 = vadd.f32 %v285, %v288
        %v291 = vadd.f32 %v286, %v289
        %s292 = sld [smem:[#allocation2 + $0x1]]
        %s293 = sld [smem:[#allocation2 + $0x32]]
        %v294 = vstv %s292
        %v295 = vmul.f32 %v294, %v225
        %v296 = vmul.f32 %v294, %v221
        %v297 = vmul.f32 %v294, %v226
        %v298 = vadd.f32 %v295, 0.0
        %v299 = vadd.f32 %v296, 0.0
        %v300 = vadd.f32 %v297, 0.0
        %v301 = vstv %s293
        %v302 = vmul.f32 %v301, %v237
        %v303 = vmul.f32 %v301, %v233
        %v304 = vmul.f32 %v301, %v238
        %v305 = vadd.f32 %v298, %v302
        %v306 = vadd.f32 %v299, %v303
        %v307 = vadd.f32 %v300, %v304
        %s308 = sld [smem:[#allocation2 + $0x2]]
        %s309 = sld [smem:[#allocation2 + $0x33]]
        %v310 = vstv %s308
        %v311 = vmul.f32 %v310, %v225
        %v312 = vmul.f32 %v310, %v221
        %v313 = vmul.f32 %v310, %v226
        %v314 = vadd.f32 %v311, 0.0
        %v315 = vadd.f32 %v312, 0.0
        %v316 = vadd.f32 %v313, 0.0
        %v317 = vstv %s309
        %v318 = vmul.f32 %v317, %v237
        %v319 = vmul.f32 %v317, %v233
        %v320 = vmul.f32 %v317, %v238
        %v321 = vadd.f32 %v314, %v318
        %v322 = vadd.f32 %v315, %v319
        %v323 = vadd.f32 %v316, %v320
        %s324 = sld [smem:[#allocation2 + $0x3]]
        %s325 = sld [smem:[#allocation2 + $0x34]]
        %v326 = vstv %s324
        %v327 = vmul.f32 %v326, %v225
        %v328 = vmul.f32 %v326, %v221
        %v329 = vmul.f32 %v326, %v226
        %v330 = vadd.f32 %v327, 0.0
        %v331 = vadd.f32 %v328, 0.0
        %v332 = vadd.f32 %v329, 0.0
        %v333 = vstv %s325
        %v334 = vmul.f32 %v333, %v237
        %v335 = vmul.f32 %v333, %v233
        %v336 = vmul.f32 %v333, %v238
        %v337 = vadd.f32 %v330, %v334
        %v338 = vadd.f32 %v331, %v335
        %v339 = vadd.f32 %v332, %v336
        %s340 = sld [smem:[#allocation2 + $0x4]]
        %s341 = sld [smem:[#allocation2 + $0x35]]
        %v342 = vstv %s340
        %v343 = vmul.f32 %v342, %v225
        %v344 = vmul.f32 %v342, %v221
        %v345 = vmul.f32 %v342, %v226
        %v346 = vadd.f32 %v343, 0.0
        %v347 = vadd.f32 %v344, 0.0
        %v348 = vadd.f32 %v345, 0.0
        %v349 = vstv %s341
        %v350 = vmul.f32 %v349, %v237
        %v351 = vmul.f32 %v349, %v233
        %v352 = vmul.f32 %v349, %v238
        %v353 = vadd.f32 %v346, %v350
        %v354 = vadd.f32 %v347, %v351
        %v355 = vadd.f32 %v348, %v352
        %s356 = sld [smem:[#allocation2 + $0x5]]
        %s357 = sld [smem:[#allocation2 + $0x36]]
        %v358 = vstv %s356
        %v359 = vmul.f32 %v358, %v225
        %v360 = vmul.f32 %v358, %v221
        %v361 = vmul.f32 %v358, %v226
        %v362 = vadd.f32 %v359, 0.0
        %v363 = vadd.f32 %v360, 0.0
        %v364 = vadd.f32 %v361, 0.0
        %v365 = vstv %s357
        %v366 = vmul.f32 %v365, %v237
        %v367 = vmul.f32 %v365, %v233
        %v368 = vmul.f32 %v365, %v238
        %v369 = vadd.f32 %v362, %v366
        %v370 = vadd.f32 %v363, %v367
        %v371 = vadd.f32 %v364, %v368
        %s372 = sld [smem:[#allocation2 + $0x6]]
        %s373 = sld [smem:[#allocation2 + $0x37]]
        %v374 = vstv %s372
        %v375 = vmul.f32 %v374, %v225
        %v376 = vmul.f32 %v374, %v221
        %v377 = vmul.f32 %v374, %v226
        %v378 = vadd.f32 %v375, 0.0
        %v379 = vadd.f32 %v376, 0.0
        %v380 = vadd.f32 %v377, 0.0
        %v381 = vstv %s373
        %v382 = vmul.f32 %v381, %v237
        %v383 = vmul.f32 %v381, %v233
        %v384 = vmul.f32 %v381, %v238
        %v385 = vadd.f32 %v378, %v382
        %v386 = vadd.f32 %v379, %v383
        %v387 = vadd.f32 %v380, %v384
        %s388 = sld [smem:[#allocation2 + $0x7]]
        %s389 = sld [smem:[#allocation2 + $0x38]]
        %v390 = vstv %s388
        %v391 = vmul.f32 %v390, %v225
        %v392 = vmul.f32 %v390, %v221
        %v393 = vmul.f32 %v390, %v226
        %397 = vrot.lane.b32.xlu0 %v391, 112
        %v398 = vpop.permute.xlu0 %397
        %399 = vrot.lane.b32.xlu0 %v392, 112
        %v400 = vpop.permute.xlu0 %399
        %401 = vrot.lane.b32.xlu0 %v393, 112
        %v402 = vpop.permute.xlu0 %401
        %vm403 = vcmask 916480
        %v404 = vsel %vm403, %v398, %v400
        %v405 = vsel %vm403, %v400, %v402
        %v408 = vadd.f32 %v290, %v404
        %v409 = vadd.f32 %v291, %v405
        %v410 = vstv %s389
        %v411 = vmul.f32 %v410, %v237
        %v412 = vmul.f32 %v410, %v233
        %v413 = vmul.f32 %v410, %v238
        %417 = vrot.lane.b32.xlu0 %v411, 112
        %v418 = vpop.permute.xlu0 %417
        %419 = vrot.lane.b32.xlu0 %v412, 112
        %v420 = vpop.permute.xlu0 %419
        %421 = vrot.lane.b32.xlu0 %v413, 112
        %v422 = vpop.permute.xlu0 %421
        %v423 = vsel %vm403, %v418, %v420
        %v424 = vsel %vm403, %v420, %v422
        %v427 = vadd.f32 %v408, %v423
        %v428 = vadd.f32 %v409, %v424
        %s429 = sld [smem:[#allocation2 + $0x8]]
        %s430 = sld [smem:[#allocation2 + $0x39]]
        %v431 = vstv %s429
        %v432 = vmul.f32 %v431, %v225
        %v433 = vmul.f32 %v431, %v221
        %v434 = vmul.f32 %v431, %v226
        %438 = vrot.lane.b32.xlu0 %v432, 112
        %v439 = vpop.permute.xlu0 %438
        %440 = vrot.lane.b32.xlu0 %v433, 112
        %v441 = vpop.permute.xlu0 %440
        %442 = vrot.lane.b32.xlu0 %v434, 112
        %v443 = vpop.permute.xlu0 %442
        %v444 = vsel %vm403, %v439, %v441
        %v445 = vsel %vm403, %v441, %v443
        %v449 = vadd.f32 %v305, %v444
        %v450 = vadd.f32 %v306, %v445
        %v451 = vadd.f32 %v307, %v443
        %v452 = vstv %s430
        %v453 = vmul.f32 %v452, %v237
        %v454 = vmul.f32 %v452, %v233
        %v455 = vmul.f32 %v452, %v238
        %459 = vrot.lane.b32.xlu0 %v453, 112
        %v460 = vpop.permute.xlu0 %459
        %461 = vrot.lane.b32.xlu0 %v454, 112
        %v462 = vpop.permute.xlu0 %461
        %463 = vrot.lane.b32.xlu0 %v455, 112
        %v464 = vpop.permute.xlu0 %463
        %v465 = vsel %vm403, %v460, %v462
        %v466 = vsel %vm403, %v462, %v464
        %v470 = vadd.f32 %v449, %v465
        %v471 = vadd.f32 %v450, %v466
        %v472 = vadd.f32 %v451, %v464
        %s473 = sld [smem:[#allocation2 + $0x9]]
        %s474 = sld [smem:[#allocation2 + $0x3a]]
        %v475 = vstv %s473
        %v476 = vmul.f32 %v475, %v225
        %v477 = vmul.f32 %v475, %v221
        %v478 = vmul.f32 %v475, %v226
        %482 = vrot.lane.b32.xlu0 %v476, 112
        %v483 = vpop.permute.xlu0 %482
        %484 = vrot.lane.b32.xlu0 %v477, 112
        %v485 = vpop.permute.xlu0 %484
        %486 = vrot.lane.b32.xlu0 %v478, 112
        %v487 = vpop.permute.xlu0 %486
        %v488 = vsel %vm403, %v483, %v485
        %v489 = vsel %vm403, %v485, %v487
        %v493 = vadd.f32 %v321, %v488
        %v494 = vadd.f32 %v322, %v489
        %v495 = vadd.f32 %v323, %v487
        %v496 = vstv %s474
        %v497 = vmul.f32 %v496, %v237
        %v498 = vmul.f32 %v496, %v233
        %v499 = vmul.f32 %v496, %v238
        %503 = vrot.lane.b32.xlu0 %v497, 112
        %v504 = vpop.permute.xlu0 %503
        %505 = vrot.lane.b32.xlu0 %v498, 112
        %v506 = vpop.permute.xlu0 %505
        %507 = vrot.lane.b32.xlu0 %v499, 112
        %v508 = vpop.permute.xlu0 %507
        %v509 = vsel %vm403, %v504, %v506
        %v510 = vsel %vm403, %v506, %v508
        %v514 = vadd.f32 %v493, %v509
        %v515 = vadd.f32 %v494, %v510
        %v516 = vadd.f32 %v495, %v508
        %s517 = sld [smem:[#allocation2 + $0xa]]
        %s518 = sld [smem:[#allocation2 + $0x3b]]
        %v519 = vstv %s517
        %v520 = vmul.f32 %v519, %v225
        %v521 = vmul.f32 %v519, %v221
        %v522 = vmul.f32 %v519, %v226
        %526 = vrot.lane.b32.xlu0 %v520, 112
        %v527 = vpop.permute.xlu0 %526
        %528 = vrot.lane.b32.xlu0 %v521, 112
        %v529 = vpop.permute.xlu0 %528
        %530 = vrot.lane.b32.xlu0 %v522, 112
        %v531 = vpop.permute.xlu0 %530
        %v532 = vsel %vm403, %v527, %v529
        %v533 = vsel %vm403, %v529, %v531
        %v537 = vadd.f32 %v337, %v532
        %v538 = vadd.f32 %v338, %v533
        %v539 = vadd.f32 %v339, %v531
        %v540 = vstv %s518
        %v541 = vmul.f32 %v540, %v237
        %v542 = vmul.f32 %v540, %v233
        %v543 = vmul.f32 %v540, %v238
        %547 = vrot.lane.b32.xlu0 %v541, 112
        %v548 = vpop.permute.xlu0 %547
        %549 = vrot.lane.b32.xlu0 %v542, 112
        %v550 = vpop.permute.xlu0 %549
        %551 = vrot.lane.b32.xlu0 %v543, 112
        %v552 = vpop.permute.xlu0 %551
        %v553 = vsel %vm403, %v548, %v550
        %v554 = vsel %vm403, %v550, %v552
        %v558 = vadd.f32 %v537, %v553
        %v559 = vadd.f32 %v538, %v554
        %v560 = vadd.f32 %v539, %v552
        %s561 = sld [smem:[#allocation2 + $0xb]]
        %s562 = sld [smem:[#allocation2 + $0x3c]]
        %v563 = vstv %s561
        %v564 = vmul.f32 %v563, %v225
        %v565 = vmul.f32 %v563, %v221
        %v566 = vmul.f32 %v563, %v226
        %570 = vrot.lane.b32.xlu0 %v564, 112
        %v571 = vpop.permute.xlu0 %570
        %572 = vrot.lane.b32.xlu0 %v565, 112
        %v573 = vpop.permute.xlu0 %572
        %574 = vrot.lane.b32.xlu0 %v566, 112
        %v575 = vpop.permute.xlu0 %574
        %v576 = vsel %vm403, %v571, %v573
        %v577 = vsel %vm403, %v573, %v575
        %v581 = vadd.f32 %v353, %v576
        %v582 = vadd.f32 %v354, %v577
        %v583 = vadd.f32 %v355, %v575
        %v584 = vstv %s562
        %v585 = vmul.f32 %v584, %v237
        %v586 = vmul.f32 %v584, %v233
        %v587 = vmul.f32 %v584, %v238
        %591 = vrot.lane.b32.xlu0 %v585, 112
        %v592 = vpop.permute.xlu0 %591
        %593 = vrot.lane.b32.xlu0 %v586, 112
        %v594 = vpop.permute.xlu0 %593
        %595 = vrot.lane.b32.xlu0 %v587, 112
        %v596 = vpop.permute.xlu0 %595
        %v597 = vsel %vm403, %v592, %v594
        %v598 = vsel %vm403, %v594, %v596
        %v602 = vadd.f32 %v581, %v597
        %v603 = vadd.f32 %v582, %v598
        %v604 = vadd.f32 %v583, %v596
        %s605 = sld [smem:[#allocation2 + $0xc]]
        %s606 = sld [smem:[#allocation2 + $0x3d]]
        %v607 = vstv %s605
        %v608 = vmul.f32 %v607, %v225
        %v609 = vmul.f32 %v607, %v221
        %v610 = vmul.f32 %v607, %v226
        %614 = vrot.lane.b32.xlu0 %v608, 112
        %v615 = vpop.permute.xlu0 %614
        %616 = vrot.lane.b32.xlu0 %v609, 112
        %v617 = vpop.permute.xlu0 %616
        %618 = vrot.lane.b32.xlu0 %v610, 112
        %v619 = vpop.permute.xlu0 %618
        %v620 = vsel %vm403, %v615, %v617
        %v621 = vsel %vm403, %v617, %v619
        %v625 = vadd.f32 %v369, %v620
        %v626 = vadd.f32 %v370, %v621
        %v627 = vadd.f32 %v371, %v619
        %v628 = vstv %s606
        %v629 = vmul.f32 %v628, %v237
        %v630 = vmul.f32 %v628, %v233
        %v631 = vmul.f32 %v628, %v238
        %635 = vrot.lane.b32.xlu0 %v629, 112
        %v636 = vpop.permute.xlu0 %635
        %637 = vrot.lane.b32.xlu0 %v630, 112
        %v638 = vpop.permute.xlu0 %637
        %639 = vrot.lane.b32.xlu0 %v631, 112
        %v640 = vpop.permute.xlu0 %639
        %v641 = vsel %vm403, %v636, %v638
        %v642 = vsel %vm403, %v638, %v640
        %v646 = vadd.f32 %v625, %v641
        %v647 = vadd.f32 %v626, %v642
        %v648 = vadd.f32 %v627, %v640
        %s649 = sld [smem:[#allocation2 + $0xd]]
        %s650 = sld [smem:[#allocation2 + $0x3e]]
        %v651 = vstv %s649
        %v652 = vmul.f32 %v651, %v225
        %v653 = vmul.f32 %v651, %v221
        %v654 = vmul.f32 %v651, %v226
        %658 = vrot.lane.b32.xlu0 %v652, 112
        %v659 = vpop.permute.xlu0 %658
        %660 = vrot.lane.b32.xlu0 %v653, 112
        %v661 = vpop.permute.xlu0 %660
        %662 = vrot.lane.b32.xlu0 %v654, 112
        %v663 = vpop.permute.xlu0 %662
        %v664 = vsel %vm403, %v659, %v661
        %v665 = vsel %vm403, %v661, %v663
        %v669 = vadd.f32 %v385, %v664
        %v670 = vadd.f32 %v386, %v665
        %v671 = vadd.f32 %v387, %v663
        %v672 = vstv %s650
        %v673 = vmul.f32 %v672, %v237
        %v674 = vmul.f32 %v672, %v233
        %v675 = vmul.f32 %v672, %v238
        %679 = vrot.lane.b32.xlu0 %v673, 112
        %v680 = vpop.permute.xlu0 %679
        %681 = vrot.lane.b32.xlu0 %v674, 112
        %v682 = vpop.permute.xlu0 %681
        %683 = vrot.lane.b32.xlu0 %v675, 112
        %v684 = vpop.permute.xlu0 %683
        %v685 = vsel %vm403, %v680, %v682
        %v686 = vsel %vm403, %v682, %v684
        %v690 = vadd.f32 %v669, %v685
        %v691 = vadd.f32 %v670, %v686
        %v692 = vadd.f32 %v671, %v684
        %s693 = sld [smem:[#allocation2 + $0xe]]
        %s694 = sld [smem:[#allocation2 + $0x3f]]
        %v695 = vstv %s693
        %v696 = vmul.f32 %v695, %v225
        %v697 = vmul.f32 %v695, %v221
        %v698 = vmul.f32 %v695, %v226
        %702 = vrot.lane.b32.xlu0 %v696, 96
        %v703 = vpop.permute.xlu0 %702
        %704 = vrot.lane.b32.xlu0 %v697, 96
        %v705 = vpop.permute.xlu0 %704
        %706 = vrot.lane.b32.xlu0 %v698, 96
        %v707 = vpop.permute.xlu0 %706
        %vm708 = vcmask 785408
        %v709 = vsel %vm708, %v703, %v705
        %v710 = vsel %vm708, %v705, %v707
        %v713 = vadd.f32 %v427, %v709
        %v714 = vadd.f32 %v428, %v710
        %v715 = vstv %s694
        %v716 = vmul.f32 %v715, %v237
        %v717 = vmul.f32 %v715, %v233
        %v718 = vmul.f32 %v715, %v238
        %722 = vrot.lane.b32.xlu0 %v716, 96
        %v723 = vpop.permute.xlu0 %722
        %724 = vrot.lane.b32.xlu0 %v717, 96
        %v725 = vpop.permute.xlu0 %724
        %726 = vrot.lane.b32.xlu0 %v718, 96
        %v727 = vpop.permute.xlu0 %726
        %v728 = vsel %vm708, %v723, %v725
        %v729 = vsel %vm708, %v725, %v727
        %v732 = vadd.f32 %v713, %v728
        %v733 = vadd.f32 %v714, %v729
        %s734 = sld [smem:[#allocation2 + $0xf]]
        %s735 = sld [smem:[#allocation2 + $0x40]]
        %v736 = vstv %s734
        %v737 = vmul.f32 %v736, %v225
        %v738 = vmul.f32 %v736, %v221
        %v739 = vmul.f32 %v736, %v226
        %743 = vrot.lane.b32.xlu0 %v737, 96
        %v744 = vpop.permute.xlu0 %743
        %745 = vrot.lane.b32.xlu0 %v738, 96
        %v746 = vpop.permute.xlu0 %745
        %747 = vrot.lane.b32.xlu0 %v739, 96
        %v748 = vpop.permute.xlu0 %747
        %v749 = vsel %vm708, %v744, %v746
        %v750 = vsel %vm708, %v746, %v748
        %v754 = vadd.f32 %v470, %v749
        %v755 = vadd.f32 %v471, %v750
        %v756 = vadd.f32 %v472, %v748
        %v757 = vstv %s735
        %v758 = vmul.f32 %v757, %v237
        %v759 = vmul.f32 %v757, %v233
        %v760 = vmul.f32 %v757, %v238
        %764 = vrot.lane.b32.xlu0 %v758, 96
        %v765 = vpop.permute.xlu0 %764
        %766 = vrot.lane.b32.xlu0 %v759, 96
        %v767 = vpop.permute.xlu0 %766
        %768 = vrot.lane.b32.xlu0 %v760, 96
        %v769 = vpop.permute.xlu0 %768
        %v770 = vsel %vm708, %v765, %v767
        %v771 = vsel %vm708, %v767, %v769
        %v775 = vadd.f32 %v754, %v770
        %v776 = vadd.f32 %v755, %v771
        %v777 = vadd.f32 %v756, %v769
        %s778 = sld [smem:[#allocation2 + $0x10]]
        %s779 = sld [smem:[#allocation2 + $0x41]]
        %v780 = vstv %s778
        %v781 = vmul.f32 %v780, %v225
        %v782 = vmul.f32 %v780, %v221
        %v783 = vmul.f32 %v780, %v226
        %787 = vrot.lane.b32.xlu0 %v781, 96
        %v788 = vpop.permute.xlu0 %787
        %789 = vrot.lane.b32.xlu0 %v782, 96
        %v790 = vpop.permute.xlu0 %789
        %791 = vrot.lane.b32.xlu0 %v783, 96
        %v792 = vpop.permute.xlu0 %791
        %v793 = vsel %vm708, %v788, %v790
        %v794 = vsel %vm708, %v790, %v792
        %v798 = vadd.f32 %v514, %v793
        %v799 = vadd.f32 %v515, %v794
        %v800 = vadd.f32 %v516, %v792
        %v801 = vstv %s779
        %v802 = vmul.f32 %v801, %v237
        %v803 = vmul.f32 %v801, %v233
        %v804 = vmul.f32 %v801, %v238
        %808 = vrot.lane.b32.xlu0 %v802, 96
        %v809 = vpop.permute.xlu0 %808
        %810 = vrot.lane.b32.xlu0 %v803, 96
        %v811 = vpop.permute.xlu0 %810
        %812 = vrot.lane.b32.xlu0 %v804, 96
        %v813 = vpop.permute.xlu0 %812
        %v814 = vsel %vm708, %v809, %v811
        %v815 = vsel %vm708, %v811, %v813
        %v819 = vadd.f32 %v798, %v814
        %v820 = vadd.f32 %v799, %v815
        %v821 = vadd.f32 %v800, %v813
        %s822 = sld [smem:[#allocation2 + $0x11]]
        %s823 = sld [smem:[#allocation2 + $0x42]]
        %v824 = vstv %s822
        %v825 = vmul.f32 %v824, %v225
        %v826 = vmul.f32 %v824, %v221
        %v827 = vmul.f32 %v824, %v226
        %831 = vrot.lane.b32.xlu0 %v825, 96
        %v832 = vpop.permute.xlu0 %831
        %833 = vrot.lane.b32.xlu0 %v826, 96
        %v834 = vpop.permute.xlu0 %833
        %835 = vrot.lane.b32.xlu0 %v827, 96
        %v836 = vpop.permute.xlu0 %835
        %v837 = vsel %vm708, %v832, %v834
        %v838 = vsel %vm708, %v834, %v836
        %v842 = vadd.f32 %v558, %v837
        %v843 = vadd.f32 %v559, %v838
        %v844 = vadd.f32 %v560, %v836
        %v845 = vstv %s823
        %v846 = vmul.f32 %v845, %v237
        %v847 = vmul.f32 %v845, %v233
        %v848 = vmul.f32 %v845, %v238
        %852 = vrot.lane.b32.xlu0 %v846, 96
        %v853 = vpop.permute.xlu0 %852
        %854 = vrot.lane.b32.xlu0 %v847, 96
        %v855 = vpop.permute.xlu0 %854
        %856 = vrot.lane.b32.xlu0 %v848, 96
        %v857 = vpop.permute.xlu0 %856
        %v858 = vsel %vm708, %v853, %v855
        %v859 = vsel %vm708, %v855, %v857
        %v863 = vadd.f32 %v842, %v858
        %v864 = vadd.f32 %v843, %v859
        %v865 = vadd.f32 %v844, %v857
        %s866 = sld [smem:[#allocation2 + $0x12]]
        %s867 = sld [smem:[#allocation2 + $0x43]]
        %v868 = vstv %s866
        %v869 = vmul.f32 %v868, %v225
        %v870 = vmul.f32 %v868, %v221
        %v871 = vmul.f32 %v868, %v226
        %875 = vrot.lane.b32.xlu0 %v869, 96
        %v876 = vpop.permute.xlu0 %875
        %877 = vrot.lane.b32.xlu0 %v870, 96
        %v878 = vpop.permute.xlu0 %877
        %879 = vrot.lane.b32.xlu0 %v871, 96
        %v880 = vpop.permute.xlu0 %879
        %v881 = vsel %vm708, %v876, %v878
        %v882 = vsel %vm708, %v878, %v880
        %v886 = vadd.f32 %v602, %v881
        %v887 = vadd.f32 %v603, %v882
        %v888 = vadd.f32 %v604, %v880
        %v889 = vstv %s867
        %v890 = vmul.f32 %v889, %v237
        %v891 = vmul.f32 %v889, %v233
        %v892 = vmul.f32 %v889, %v238
        %896 = vrot.lane.b32.xlu0 %v890, 96
        %v897 = vpop.permute.xlu0 %896
        %898 = vrot.lane.b32.xlu0 %v891, 96
        %v899 = vpop.permute.xlu0 %898
        %900 = vrot.lane.b32.xlu0 %v892, 96
        %v901 = vpop.permute.xlu0 %900
        %v902 = vsel %vm708, %v897, %v899
        %v903 = vsel %vm708, %v899, %v901
        %v907 = vadd.f32 %v886, %v902
        %v908 = vadd.f32 %v887, %v903
        %v909 = vadd.f32 %v888, %v901
        %s910 = sld [smem:[#allocation2 + $0x13]]
        %s911 = sld [smem:[#allocation2 + $0x44]]
        %v912 = vstv %s910
        %v913 = vmul.f32 %v912, %v225
        %v914 = vmul.f32 %v912, %v221
        %v915 = vmul.f32 %v912, %v226
        %919 = vrot.lane.b32.xlu0 %v913, 96
        %v920 = vpop.permute.xlu0 %919
        %921 = vrot.lane.b32.xlu0 %v914, 96
        %v922 = vpop.permute.xlu0 %921
        %923 = vrot.lane.b32.xlu0 %v915, 96
        %v924 = vpop.permute.xlu0 %923
        %v925 = vsel %vm708, %v920, %v922
        %v926 = vsel %vm708, %v922, %v924
        %v930 = vadd.f32 %v646, %v925
        %v931 = vadd.f32 %v647, %v926
        %v932 = vadd.f32 %v648, %v924
        %v933 = vstv %s911
        %v934 = vmul.f32 %v933, %v237
        %v935 = vmul.f32 %v933, %v233
        %v936 = vmul.f32 %v933, %v238
        %940 = vrot.lane.b32.xlu0 %v934, 96
        %v941 = vpop.permute.xlu0 %940
        %942 = vrot.lane.b32.xlu0 %v935, 96
        %v943 = vpop.permute.xlu0 %942
        %944 = vrot.lane.b32.xlu0 %v936, 96
        %v945 = vpop.permute.xlu0 %944
        %v946 = vsel %vm708, %v941, %v943
        %v947 = vsel %vm708, %v943, %v945
        %v951 = vadd.f32 %v930, %v946
        %v952 = vadd.f32 %v931, %v947
        %v953 = vadd.f32 %v932, %v945
        %s954 = sld [smem:[#allocation2 + $0x14]]
        %s955 = sld [smem:[#allocation2 + $0x45]]
        %v956 = vstv %s954
        %v957 = vmul.f32 %v956, %v225
        %v958 = vmul.f32 %v956, %v221
        %v959 = vmul.f32 %v956, %v226
        %963 = vrot.lane.b32.xlu0 %v957, 96
        %v964 = vpop.permute.xlu0 %963
        %965 = vrot.lane.b32.xlu0 %v958, 96
        %v966 = vpop.permute.xlu0 %965
        %967 = vrot.lane.b32.xlu0 %v959, 96
        %v968 = vpop.permute.xlu0 %967
        %v969 = vsel %vm708, %v964, %v966
        %v970 = vsel %vm708, %v966, %v968
        %v974 = vadd.f32 %v690, %v969
        %v975 = vadd.f32 %v691, %v970
        %v976 = vadd.f32 %v692, %v968
        %v977 = vstv %s955
        %v978 = vmul.f32 %v977, %v237
        %v979 = vmul.f32 %v977, %v233
        %v980 = vmul.f32 %v977, %v238
        %984 = vrot.lane.b32.xlu0 %v978, 96
        %v985 = vpop.permute.xlu0 %984
        %986 = vrot.lane.b32.xlu0 %v979, 96
        %v987 = vpop.permute.xlu0 %986
        %988 = vrot.lane.b32.xlu0 %v980, 96
        %v989 = vpop.permute.xlu0 %988
        %v990 = vsel %vm708, %v985, %v987
        %v991 = vsel %vm708, %v987, %v989
        %v995 = vadd.f32 %v974, %v990
        %v996 = vadd.f32 %v975, %v991
        %v997 = vadd.f32 %v976, %v989
        %s998 = sld [smem:[#allocation2 + $0x15]]
        %s999 = sld [smem:[#allocation2 + $0x46]]
        %v1000 = vstv %s998
        %v1001 = vmul.f32 %v1000, %v225
        %v1002 = vmul.f32 %v1000, %v221
        %v1003 = vmul.f32 %v1000, %v226
        %1007 = vrot.lane.b32.xlu0 %v1001, 80
        %v1008 = vpop.permute.xlu0 %1007
        %1009 = vrot.lane.b32.xlu0 %v1002, 80
        %v1010 = vpop.permute.xlu0 %1009
        %1011 = vrot.lane.b32.xlu0 %v1003, 80
        %v1012 = vpop.permute.xlu0 %1011
        %vm1013 = vcmask 654336
        %v1014 = vsel %vm1013, %v1008, %v1010
        %v1015 = vsel %vm1013, %v1010, %v1012
        %v1018 = vadd.f32 %v732, %v1014
        %v1019 = vadd.f32 %v733, %v1015
        %v1020 = vstv %s999
        %v1021 = vmul.f32 %v1020, %v237
        %v1022 = vmul.f32 %v1020, %v233
        %v1023 = vmul.f32 %v1020, %v238
        %1027 = vrot.lane.b32.xlu0 %v1021, 80
        %v1028 = vpop.permute.xlu0 %1027
        %1029 = vrot.lane.b32.xlu0 %v1022, 80
        %v1030 = vpop.permute.xlu0 %1029
        %1031 = vrot.lane.b32.xlu0 %v1023, 80
        %v1032 = vpop.permute.xlu0 %1031
        %v1033 = vsel %vm1013, %v1028, %v1030
        %v1034 = vsel %vm1013, %v1030, %v1032
        %v1037 = vadd.f32 %v1018, %v1033
        %v1038 = vadd.f32 %v1019, %v1034
        %s1039 = sld [smem:[#allocation2 + $0x16]]
        %s1040 = sld [smem:[#allocation2 + $0x47]]
        %v1041 = vstv %s1039
        %v1042 = vmul.f32 %v1041, %v225
        %v1043 = vmul.f32 %v1041, %v221
        %v1044 = vmul.f32 %v1041, %v226
        %1048 = vrot.lane.b32.xlu0 %v1042, 80
        %v1049 = vpop.permute.xlu0 %1048
        %1050 = vrot.lane.b32.xlu0 %v1043, 80
        %v1051 = vpop.permute.xlu0 %1050
        %1052 = vrot.lane.b32.xlu0 %v1044, 80
        %v1053 = vpop.permute.xlu0 %1052
        %v1054 = vsel %vm1013, %v1049, %v1051
        %v1055 = vsel %vm1013, %v1051, %v1053
        %v1059 = vadd.f32 %v775, %v1054
        %v1060 = vadd.f32 %v776, %v1055
        %v1061 = vadd.f32 %v777, %v1053
        %v1062 = vstv %s1040
        %v1063 = vmul.f32 %v1062, %v237
        %v1064 = vmul.f32 %v1062, %v233
        %v1065 = vmul.f32 %v1062, %v238
        %1069 = vrot.lane.b32.xlu0 %v1063, 80
        %v1070 = vpop.permute.xlu0 %1069
        %1071 = vrot.lane.b32.xlu0 %v1064, 80
        %v1072 = vpop.permute.xlu0 %1071
        %1073 = vrot.lane.b32.xlu0 %v1065, 80
        %v1074 = vpop.permute.xlu0 %1073
        %v1075 = vsel %vm1013, %v1070, %v1072
        %v1076 = vsel %vm1013, %v1072, %v1074
        %v1080 = vadd.f32 %v1059, %v1075
        %v1081 = vadd.f32 %v1060, %v1076
        %v1082 = vadd.f32 %v1061, %v1074
        %s1083 = sld [smem:[#allocation2 + $0x17]]
        %s1084 = sld [smem:[#allocation2 + $0x48]]
        %v1085 = vstv %s1083
        %v1086 = vmul.f32 %v1085, %v225
        %v1087 = vmul.f32 %v1085, %v221
        %v1088 = vmul.f32 %v1085, %v226
        %1092 = vrot.lane.b32.xlu0 %v1086, 80
        %v1093 = vpop.permute.xlu0 %1092
        %1094 = vrot.lane.b32.xlu0 %v1087, 80
        %v1095 = vpop.permute.xlu0 %1094
        %1096 = vrot.lane.b32.xlu0 %v1088, 80
        %v1097 = vpop.permute.xlu0 %1096
        %v1098 = vsel %vm1013, %v1093, %v1095
        %v1099 = vsel %vm1013, %v1095, %v1097
        %v1103 = vadd.f32 %v819, %v1098
        %v1104 = vadd.f32 %v820, %v1099
        %v1105 = vadd.f32 %v821, %v1097
        %v1106 = vstv %s1084
        %v1107 = vmul.f32 %v1106, %v237
        %v1108 = vmul.f32 %v1106, %v233
        %v1109 = vmul.f32 %v1106, %v238
        %1113 = vrot.lane.b32.xlu0 %v1107, 80
        %v1114 = vpop.permute.xlu0 %1113
        %1115 = vrot.lane.b32.xlu0 %v1108, 80
        %v1116 = vpop.permute.xlu0 %1115
        %1117 = vrot.lane.b32.xlu0 %v1109, 80
        %v1118 = vpop.permute.xlu0 %1117
        %v1119 = vsel %vm1013, %v1114, %v1116
        %v1120 = vsel %vm1013, %v1116, %v1118
        %v1124 = vadd.f32 %v1103, %v1119
        %v1125 = vadd.f32 %v1104, %v1120
        %v1126 = vadd.f32 %v1105, %v1118
        %s1127 = sld [smem:[#allocation2 + $0x18]]
        %s1128 = sld [smem:[#allocation2 + $0x49]]
        %v1129 = vstv %s1127
        %v1130 = vmul.f32 %v1129, %v225
        %v1131 = vmul.f32 %v1129, %v221
        %v1132 = vmul.f32 %v1129, %v226
        %1136 = vrot.lane.b32.xlu0 %v1130, 80
        %v1137 = vpop.permute.xlu0 %1136
        %1138 = vrot.lane.b32.xlu0 %v1131, 80
        %v1139 = vpop.permute.xlu0 %1138
        %1140 = vrot.lane.b32.xlu0 %v1132, 80
        %v1141 = vpop.permute.xlu0 %1140
        %v1142 = vsel %vm1013, %v1137, %v1139
        %v1143 = vsel %vm1013, %v1139, %v1141
        %v1147 = vadd.f32 %v863, %v1142
        %v1148 = vadd.f32 %v864, %v1143
        %v1149 = vadd.f32 %v865, %v1141
        %v1150 = vstv %s1128
        %v1151 = vmul.f32 %v1150, %v237
        %v1152 = vmul.f32 %v1150, %v233
        %v1153 = vmul.f32 %v1150, %v238
        %1157 = vrot.lane.b32.xlu0 %v1151, 80
        %v1158 = vpop.permute.xlu0 %1157
        %1159 = vrot.lane.b32.xlu0 %v1152, 80
        %v1160 = vpop.permute.xlu0 %1159
        %1161 = vrot.lane.b32.xlu0 %v1153, 80
        %v1162 = vpop.permute.xlu0 %1161
        %v1163 = vsel %vm1013, %v1158, %v1160
        %v1164 = vsel %vm1013, %v1160, %v1162
        %v1168 = vadd.f32 %v1147, %v1163
        %v1169 = vadd.f32 %v1148, %v1164
        %v1170 = vadd.f32 %v1149, %v1162
        %s1171 = sld [smem:[#allocation2 + $0x19]]
        %s1172 = sld [smem:[#allocation2 + $0x4a]]
        %v1173 = vstv %s1171
        %v1174 = vmul.f32 %v1173, %v225
        %v1175 = vmul.f32 %v1173, %v221
        %v1176 = vmul.f32 %v1173, %v226
        %1180 = vrot.lane.b32.xlu0 %v1174, 80
        %v1181 = vpop.permute.xlu0 %1180
        %1182 = vrot.lane.b32.xlu0 %v1175, 80
        %v1183 = vpop.permute.xlu0 %1182
        %1184 = vrot.lane.b32.xlu0 %v1176, 80
        %v1185 = vpop.permute.xlu0 %1184
        %v1186 = vsel %vm1013, %v1181, %v1183
        %v1187 = vsel %vm1013, %v1183, %v1185
        %v1191 = vadd.f32 %v907, %v1186
        %v1192 = vadd.f32 %v908, %v1187
        %v1193 = vadd.f32 %v909, %v1185
        %v1194 = vstv %s1172
        %v1195 = vmul.f32 %v1194, %v237
        %v1196 = vmul.f32 %v1194, %v233
        %v1197 = vmul.f32 %v1194, %v238
        %1201 = vrot.lane.b32.xlu0 %v1195, 80
        %v1202 = vpop.permute.xlu0 %1201
        %1203 = vrot.lane.b32.xlu0 %v1196, 80
        %v1204 = vpop.permute.xlu0 %1203
        %1205 = vrot.lane.b32.xlu0 %v1197, 80
        %v1206 = vpop.permute.xlu0 %1205
        %v1207 = vsel %vm1013, %v1202, %v1204
        %v1208 = vsel %vm1013, %v1204, %v1206
        %v1212 = vadd.f32 %v1191, %v1207
        %v1213 = vadd.f32 %v1192, %v1208
        %v1214 = vadd.f32 %v1193, %v1206
        %s1215 = sld [smem:[#allocation2 + $0x1a]]
        %s1216 = sld [smem:[#allocation2 + $0x4b]]
        %v1217 = vstv %s1215
        %v1218 = vmul.f32 %v1217, %v225
        %v1219 = vmul.f32 %v1217, %v221
        %v1220 = vmul.f32 %v1217, %v226
        %1224 = vrot.lane.b32.xlu0 %v1218, 80
        %v1225 = vpop.permute.xlu0 %1224
        %1226 = vrot.lane.b32.xlu0 %v1219, 80
        %v1227 = vpop.permute.xlu0 %1226
        %1228 = vrot.lane.b32.xlu0 %v1220, 80
        %v1229 = vpop.permute.xlu0 %1228
        %v1230 = vsel %vm1013, %v1225, %v1227
        %v1231 = vsel %vm1013, %v1227, %v1229
        %v1235 = vadd.f32 %v951, %v1230
        %v1236 = vadd.f32 %v952, %v1231
        %v1237 = vadd.f32 %v953, %v1229
        %v1238 = vstv %s1216
        %v1239 = vmul.f32 %v1238, %v237
        %v1240 = vmul.f32 %v1238, %v233
        %v1241 = vmul.f32 %v1238, %v238
        %1245 = vrot.lane.b32.xlu0 %v1239, 80
        %v1246 = vpop.permute.xlu0 %1245
        %1247 = vrot.lane.b32.xlu0 %v1240, 80
        %v1248 = vpop.permute.xlu0 %1247
        %1249 = vrot.lane.b32.xlu0 %v1241, 80
        %v1250 = vpop.permute.xlu0 %1249
        %v1251 = vsel %vm1013, %v1246, %v1248
        %v1252 = vsel %vm1013, %v1248, %v1250
        %v1256 = vadd.f32 %v1235, %v1251
        %v1257 = vadd.f32 %v1236, %v1252
        %v1258 = vadd.f32 %v1237, %v1250
        %s1259 = sld [smem:[#allocation2 + $0x1b]]
        %s1260 = sld [smem:[#allocation2 + $0x4c]]
        %v1261 = vstv %s1259
        %v1262 = vmul.f32 %v1261, %v225
        %v1263 = vmul.f32 %v1261, %v221
        %v1264 = vmul.f32 %v1261, %v226
        %1268 = vrot.lane.b32.xlu0 %v1262, 80
        %v1269 = vpop.permute.xlu0 %1268
        %1270 = vrot.lane.b32.xlu0 %v1263, 80
        %v1271 = vpop.permute.xlu0 %1270
        %1272 = vrot.lane.b32.xlu0 %v1264, 80
        %v1273 = vpop.permute.xlu0 %1272
        %v1274 = vsel %vm1013, %v1269, %v1271
        %v1275 = vsel %vm1013, %v1271, %v1273
        %v1279 = vadd.f32 %v995, %v1274
        %v1280 = vadd.f32 %v996, %v1275
        %v1281 = vadd.f32 %v997, %v1273
        %v1282 = vstv %s1260
        %v1283 = vmul.f32 %v1282, %v237
        %v1284 = vmul.f32 %v1282, %v233
        %v1285 = vmul.f32 %v1282, %v238
        %1289 = vrot.lane.b32.xlu0 %v1283, 80
        %v1290 = vpop.permute.xlu0 %1289
        %1291 = vrot.lane.b32.xlu0 %v1284, 80
        %v1292 = vpop.permute.xlu0 %1291
        %1293 = vrot.lane.b32.xlu0 %v1285, 80
        %v1294 = vpop.permute.xlu0 %1293
        %v1295 = vsel %vm1013, %v1290, %v1292
        %v1296 = vsel %vm1013, %v1292, %v1294
        %v1300 = vadd.f32 %v1279, %v1295
        %v1301 = vadd.f32 %v1280, %v1296
        %v1302 = vadd.f32 %v1281, %v1294
        %s1303 = sld [smem:[#allocation2 + $0x1c]]
        %s1304 = sld [smem:[#allocation2 + $0x4d]]
        %v1305 = vstv %s1303
        %v1306 = vmul.f32 %v1305, %v225
        %v1307 = vmul.f32 %v1305, %v221
        %v1308 = vmul.f32 %v1305, %v226
        %1312 = vrot.lane.b32.xlu0 %v1306, 64
        %v1313 = vpop.permute.xlu0 %1312
        %1314 = vrot.lane.b32.xlu0 %v1307, 64
        %v1315 = vpop.permute.xlu0 %1314
        %1316 = vrot.lane.b32.xlu0 %v1308, 64
        %v1317 = vpop.permute.xlu0 %1316
        %vm1318 = vcmask 523264
        %v1319 = vsel %vm1318, %v1313, %v1315
        %v1320 = vsel %vm1318, %v1315, %v1317
        %v1323 = vadd.f32 %v1037, %v1319
        %v1324 = vadd.f32 %v1038, %v1320
        %v1325 = vstv %s1304
        %v1326 = vmul.f32 %v1325, %v237
        %v1327 = vmul.f32 %v1325, %v233
        %v1328 = vmul.f32 %v1325, %v238
        %1332 = vrot.lane.b32.xlu0 %v1326, 64
        %v1333 = vpop.permute.xlu0 %1332
        %1334 = vrot.lane.b32.xlu0 %v1327, 64
        %v1335 = vpop.permute.xlu0 %1334
        %1336 = vrot.lane.b32.xlu0 %v1328, 64
        %v1337 = vpop.permute.xlu0 %1336
        %v1338 = vsel %vm1318, %v1333, %v1335
        %v1339 = vsel %vm1318, %v1335, %v1337
        %v1342 = vadd.f32 %v1323, %v1338
        %v1343 = vadd.f32 %v1324, %v1339
        %s1344 = sld [smem:[#allocation2 + $0x1d]]
        %s1345 = sld [smem:[#allocation2 + $0x4e]]
        %v1346 = vstv %s1344
        %v1347 = vmul.f32 %v1346, %v225
        %v1348 = vmul.f32 %v1346, %v221
        %v1349 = vmul.f32 %v1346, %v226
        %1353 = vrot.lane.b32.xlu0 %v1347, 64
        %v1354 = vpop.permute.xlu0 %1353
        %1355 = vrot.lane.b32.xlu0 %v1348, 64
        %v1356 = vpop.permute.xlu0 %1355
        %1357 = vrot.lane.b32.xlu0 %v1349, 64
        %v1358 = vpop.permute.xlu0 %1357
        %v1359 = vsel %vm1318, %v1354, %v1356
        %v1360 = vsel %vm1318, %v1356, %v1358
        %v1364 = vadd.f32 %v1080, %v1359
        %v1365 = vadd.f32 %v1081, %v1360
        %v1366 = vadd.f32 %v1082, %v1358
        %v1367 = vstv %s1345
        %v1368 = vmul.f32 %v1367, %v237
        %v1369 = vmul.f32 %v1367, %v233
        %v1370 = vmul.f32 %v1367, %v238
        %1374 = vrot.lane.b32.xlu0 %v1368, 64
        %v1375 = vpop.permute.xlu0 %1374
        %1376 = vrot.lane.b32.xlu0 %v1369, 64
        %v1377 = vpop.permute.xlu0 %1376
        %1378 = vrot.lane.b32.xlu0 %v1370, 64
        %v1379 = vpop.permute.xlu0 %1378
        %v1380 = vsel %vm1318, %v1375, %v1377
        %v1381 = vsel %vm1318, %v1377, %v1379
        %v1385 = vadd.f32 %v1364, %v1380
        %v1386 = vadd.f32 %v1365, %v1381
        %v1387 = vadd.f32 %v1366, %v1379
        %s1388 = sld [smem:[#allocation2 + $0x1e]]
        %s1389 = sld [smem:[#allocation2 + $0x4f]]
        %v1390 = vstv %s1388
        %v1391 = vmul.f32 %v1390, %v225
        %v1392 = vmul.f32 %v1390, %v221
        %v1393 = vmul.f32 %v1390, %v226
        %1397 = vrot.lane.b32.xlu0 %v1391, 64
        %v1398 = vpop.permute.xlu0 %1397
        %1399 = vrot.lane.b32.xlu0 %v1392, 64
        %v1400 = vpop.permute.xlu0 %1399
        %1401 = vrot.lane.b32.xlu0 %v1393, 64
        %v1402 = vpop.permute.xlu0 %1401
        %v1403 = vsel %vm1318, %v1398, %v1400
        %v1404 = vsel %vm1318, %v1400, %v1402
        %v1408 = vadd.f32 %v1124, %v1403
        %v1409 = vadd.f32 %v1125, %v1404
        %v1410 = vadd.f32 %v1126, %v1402
        %v1411 = vstv %s1389
        %v1412 = vmul.f32 %v1411, %v237
        %v1413 = vmul.f32 %v1411, %v233
        %v1414 = vmul.f32 %v1411, %v238
        %1418 = vrot.lane.b32.xlu0 %v1412, 64
        %v1419 = vpop.permute.xlu0 %1418
        %1420 = vrot.lane.b32.xlu0 %v1413, 64
        %v1421 = vpop.permute.xlu0 %1420
        %1422 = vrot.lane.b32.xlu0 %v1414, 64
        %v1423 = vpop.permute.xlu0 %1422
        %v1424 = vsel %vm1318, %v1419, %v1421
        %v1425 = vsel %vm1318, %v1421, %v1423
        %v1429 = vadd.f32 %v1408, %v1424
        %v1430 = vadd.f32 %v1409, %v1425
        %v1431 = vadd.f32 %v1410, %v1423
        %s1432 = sld [smem:[#allocation2 + $0x1f]]
        %s1433 = sld [smem:[#allocation2 + $0x50]]
        %v1434 = vstv %s1432
        %v1435 = vmul.f32 %v1434, %v225
        %v1436 = vmul.f32 %v1434, %v221
        %v1437 = vmul.f32 %v1434, %v226
        %1441 = vrot.lane.b32.xlu0 %v1435, 64
        %v1442 = vpop.permute.xlu0 %1441
        %1443 = vrot.lane.b32.xlu0 %v1436, 64
        %v1444 = vpop.permute.xlu0 %1443
        %1445 = vrot.lane.b32.xlu0 %v1437, 64
        %v1446 = vpop.permute.xlu0 %1445
        %v1447 = vsel %vm1318, %v1442, %v1444
        %v1448 = vsel %vm1318, %v1444, %v1446
        %v1452 = vadd.f32 %v1168, %v1447
        %v1453 = vadd.f32 %v1169, %v1448
        %v1454 = vadd.f32 %v1170, %v1446
        %v1455 = vstv %s1433
        %v1456 = vmul.f32 %v1455, %v237
        %v1457 = vmul.f32 %v1455, %v233
        %v1458 = vmul.f32 %v1455, %v238
        %1462 = vrot.lane.b32.xlu0 %v1456, 64
        %v1463 = vpop.permute.xlu0 %1462
        %1464 = vrot.lane.b32.xlu0 %v1457, 64
        %v1465 = vpop.permute.xlu0 %1464
        %1466 = vrot.lane.b32.xlu0 %v1458, 64
        %v1467 = vpop.permute.xlu0 %1466
        %v1468 = vsel %vm1318, %v1463, %v1465
        %v1469 = vsel %vm1318, %v1465, %v1467
        %v1473 = vadd.f32 %v1452, %v1468
        %v1474 = vadd.f32 %v1453, %v1469
        %v1475 = vadd.f32 %v1454, %v1467
        %s1476 = sld [smem:[#allocation2 + $0x20]]
        %s1477 = sld [smem:[#allocation2 + $0x51]]
        %v1478 = vstv %s1476
        %v1479 = vmul.f32 %v1478, %v225
        %v1480 = vmul.f32 %v1478, %v221
        %v1481 = vmul.f32 %v1478, %v226
        %1485 = vrot.lane.b32.xlu0 %v1479, 64
        %v1486 = vpop.permute.xlu0 %1485
        %1487 = vrot.lane.b32.xlu0 %v1480, 64
        %v1488 = vpop.permute.xlu0 %1487
        %1489 = vrot.lane.b32.xlu0 %v1481, 64
        %v1490 = vpop.permute.xlu0 %1489
        %v1491 = vsel %vm1318, %v1486, %v1488
        %v1492 = vsel %vm1318, %v1488, %v1490
        %v1496 = vadd.f32 %v1212, %v1491
        %v1497 = vadd.f32 %v1213, %v1492
        %v1498 = vadd.f32 %v1214, %v1490
        %v1499 = vstv %s1477
        %v1500 = vmul.f32 %v1499, %v237
        %v1501 = vmul.f32 %v1499, %v233
        %v1502 = vmul.f32 %v1499, %v238
        %1506 = vrot.lane.b32.xlu0 %v1500, 64
        %v1507 = vpop.permute.xlu0 %1506
        %1508 = vrot.lane.b32.xlu0 %v1501, 64
        %v1509 = vpop.permute.xlu0 %1508
        %1510 = vrot.lane.b32.xlu0 %v1502, 64
        %v1511 = vpop.permute.xlu0 %1510
        %v1512 = vsel %vm1318, %v1507, %v1509
        %v1513 = vsel %vm1318, %v1509, %v1511
        %v1517 = vadd.f32 %v1496, %v1512
        %v1518 = vadd.f32 %v1497, %v1513
        %v1519 = vadd.f32 %v1498, %v1511
        %s1520 = sld [smem:[#allocation2 + $0x21]]
        %s1521 = sld [smem:[#allocation2 + $0x52]]
        %v1522 = vstv %s1520
        %v1523 = vmul.f32 %v1522, %v225
        %v1524 = vmul.f32 %v1522, %v221
        %v1525 = vmul.f32 %v1522, %v226
        %1529 = vrot.lane.b32.xlu0 %v1523, 64
        %v1530 = vpop.permute.xlu0 %1529
        %1531 = vrot.lane.b32.xlu0 %v1524, 64
        %v1532 = vpop.permute.xlu0 %1531
        %1533 = vrot.lane.b32.xlu0 %v1525, 64
        %v1534 = vpop.permute.xlu0 %1533
        %v1535 = vsel %vm1318, %v1530, %v1532
        %v1536 = vsel %vm1318, %v1532, %v1534
        %v1540 = vadd.f32 %v1256, %v1535
        %v1541 = vadd.f32 %v1257, %v1536
        %v1542 = vadd.f32 %v1258, %v1534
        %v1543 = vstv %s1521
        %v1544 = vmul.f32 %v1543, %v237
        %v1545 = vmul.f32 %v1543, %v233
        %v1546 = vmul.f32 %v1543, %v238
        %1550 = vrot.lane.b32.xlu0 %v1544, 64
        %v1551 = vpop.permute.xlu0 %1550
        %1552 = vrot.lane.b32.xlu0 %v1545, 64
        %v1553 = vpop.permute.xlu0 %1552
        %1554 = vrot.lane.b32.xlu0 %v1546, 64
        %v1555 = vpop.permute.xlu0 %1554
        %v1556 = vsel %vm1318, %v1551, %v1553
        %v1557 = vsel %vm1318, %v1553, %v1555
        %v1561 = vadd.f32 %v1540, %v1556
        %v1562 = vadd.f32 %v1541, %v1557
        %v1563 = vadd.f32 %v1542, %v1555
        %s1564 = sld [smem:[#allocation2 + $0x22]]
        %s1565 = sld [smem:[#allocation2 + $0x53]]
        %v1566 = vstv %s1564
        %v1567 = vmul.f32 %v1566, %v225
        %v1568 = vmul.f32 %v1566, %v221
        %v1569 = vmul.f32 %v1566, %v226
        %1573 = vrot.lane.b32.xlu0 %v1567, 64
        %v1574 = vpop.permute.xlu0 %1573
        %1575 = vrot.lane.b32.xlu0 %v1568, 64
        %v1576 = vpop.permute.xlu0 %1575
        %1577 = vrot.lane.b32.xlu0 %v1569, 64
        %v1578 = vpop.permute.xlu0 %1577
        %v1579 = vsel %vm1318, %v1574, %v1576
        %v1580 = vsel %vm1318, %v1576, %v1578
        %v1584 = vadd.f32 %v1300, %v1579
        %v1585 = vadd.f32 %v1301, %v1580
        %v1586 = vadd.f32 %v1302, %v1578
        %v1587 = vstv %s1565
        %v1588 = vmul.f32 %v1587, %v237
        %v1589 = vmul.f32 %v1587, %v233
        %v1590 = vmul.f32 %v1587, %v238
        %1594 = vrot.lane.b32.xlu0 %v1588, 64
        %v1595 = vpop.permute.xlu0 %1594
        %1596 = vrot.lane.b32.xlu0 %v1589, 64
        %v1597 = vpop.permute.xlu0 %1596
        %1598 = vrot.lane.b32.xlu0 %v1590, 64
        %v1599 = vpop.permute.xlu0 %1598
        %v1600 = vsel %vm1318, %v1595, %v1597
        %v1601 = vsel %vm1318, %v1597, %v1599
        %v1605 = vadd.f32 %v1584, %v1600
        %v1606 = vadd.f32 %v1585, %v1601
        %v1607 = vadd.f32 %v1586, %v1599
        %s1608 = sld [smem:[#allocation2 + $0x23]]
        %s1609 = sld [smem:[#allocation2 + $0x54]]
        %v1610 = vstv %s1608
        %v1611 = vmul.f32 %v1610, %v225
        %v1612 = vmul.f32 %v1610, %v221
        %v1613 = vmul.f32 %v1610, %v226
        %1617 = vrot.lane.b32.xlu0 %v1611, 48
        %v1618 = vpop.permute.xlu0 %1617
        %1619 = vrot.lane.b32.xlu0 %v1612, 48
        %v1620 = vpop.permute.xlu0 %1619
        %1621 = vrot.lane.b32.xlu0 %v1613, 48
        %v1622 = vpop.permute.xlu0 %1621
        %vm1623 = vcmask 392192
        %v1624 = vsel %vm1623, %v1618, %v1620
        %v1625 = vsel %vm1623, %v1620, %v1622
        %v1628 = vadd.f32 %v1342, %v1624
        %v1629 = vadd.f32 %v1343, %v1625
        %v1630 = vstv %s1609
        %v1631 = vmul.f32 %v1630, %v237
        %v1632 = vmul.f32 %v1630, %v233
        %v1633 = vmul.f32 %v1630, %v238
        %1637 = vrot.lane.b32.xlu0 %v1631, 48
        %v1638 = vpop.permute.xlu0 %1637
        %1639 = vrot.lane.b32.xlu0 %v1632, 48
        %v1640 = vpop.permute.xlu0 %1639
        %1641 = vrot.lane.b32.xlu0 %v1633, 48
        %v1642 = vpop.permute.xlu0 %1641
        %v1643 = vsel %vm1623, %v1638, %v1640
        %v1644 = vsel %vm1623, %v1640, %v1642
        %v1647 = vadd.f32 %v1628, %v1643
        %v1648 = vadd.f32 %v1629, %v1644
        %s1649 = sld [smem:[#allocation2 + $0x24]]
        %s1650 = sld [smem:[#allocation2 + $0x55]]
        %v1651 = vstv %s1649
        %v1652 = vmul.f32 %v1651, %v225
        %v1653 = vmul.f32 %v1651, %v221
        %v1654 = vmul.f32 %v1651, %v226
        %1658 = vrot.lane.b32.xlu0 %v1652, 48
        %v1659 = vpop.permute.xlu0 %1658
        %1660 = vrot.lane.b32.xlu0 %v1653, 48
        %v1661 = vpop.permute.xlu0 %1660
        %1662 = vrot.lane.b32.xlu0 %v1654, 48
        %v1663 = vpop.permute.xlu0 %1662
        %v1664 = vsel %vm1623, %v1659, %v1661
        %v1665 = vsel %vm1623, %v1661, %v1663
        %v1669 = vadd.f32 %v1385, %v1664
        %v1670 = vadd.f32 %v1386, %v1665
        %v1671 = vadd.f32 %v1387, %v1663
        %v1672 = vstv %s1650
        %v1673 = vmul.f32 %v1672, %v237
        %v1674 = vmul.f32 %v1672, %v233
        %v1675 = vmul.f32 %v1672, %v238
        %1679 = vrot.lane.b32.xlu0 %v1673, 48
        %v1680 = vpop.permute.xlu0 %1679
        %1681 = vrot.lane.b32.xlu0 %v1674, 48
        %v1682 = vpop.permute.xlu0 %1681
        %1683 = vrot.lane.b32.xlu0 %v1675, 48
        %v1684 = vpop.permute.xlu0 %1683
        %v1685 = vsel %vm1623, %v1680, %v1682
        %v1686 = vsel %vm1623, %v1682, %v1684
        %v1690 = vadd.f32 %v1669, %v1685
        %v1691 = vadd.f32 %v1670, %v1686
        %v1692 = vadd.f32 %v1671, %v1684
        %s1693 = sld [smem:[#allocation2 + $0x25]]
        %s1694 = sld [smem:[#allocation2 + $0x56]]
        %v1695 = vstv %s1693
        %v1696 = vmul.f32 %v1695, %v225
        %v1697 = vmul.f32 %v1695, %v221
        %v1698 = vmul.f32 %v1695, %v226
        %1702 = vrot.lane.b32.xlu0 %v1696, 48
        %v1703 = vpop.permute.xlu0 %1702
        %1704 = vrot.lane.b32.xlu0 %v1697, 48
        %v1705 = vpop.permute.xlu0 %1704
        %1706 = vrot.lane.b32.xlu0 %v1698, 48
        %v1707 = vpop.permute.xlu0 %1706
        %v1708 = vsel %vm1623, %v1703, %v1705
        %v1709 = vsel %vm1623, %v1705, %v1707
        %v1713 = vadd.f32 %v1429, %v1708
        %v1714 = vadd.f32 %v1430, %v1709
        %v1715 = vadd.f32 %v1431, %v1707
        %v1716 = vstv %s1694
        %v1717 = vmul.f32 %v1716, %v237
        %v1718 = vmul.f32 %v1716, %v233
        %v1719 = vmul.f32 %v1716, %v238
        %1723 = vrot.lane.b32.xlu0 %v1717, 48
        %v1724 = vpop.permute.xlu0 %1723
        %1725 = vrot.lane.b32.xlu0 %v1718, 48
        %v1726 = vpop.permute.xlu0 %1725
        %1727 = vrot.lane.b32.xlu0 %v1719, 48
        %v1728 = vpop.permute.xlu0 %1727
        %v1729 = vsel %vm1623, %v1724, %v1726
        %v1730 = vsel %vm1623, %v1726, %v1728
        %v1734 = vadd.f32 %v1713, %v1729
        %v1735 = vadd.f32 %v1714, %v1730
        %v1736 = vadd.f32 %v1715, %v1728
        %s1737 = sld [smem:[#allocation2 + $0x26]]
        %s1738 = sld [smem:[#allocation2 + $0x57]]
        %v1739 = vstv %s1737
        %v1740 = vmul.f32 %v1739, %v225
        %v1741 = vmul.f32 %v1739, %v221
        %v1742 = vmul.f32 %v1739, %v226
        %1746 = vrot.lane.b32.xlu0 %v1740, 48
        %v1747 = vpop.permute.xlu0 %1746
        %1748 = vrot.lane.b32.xlu0 %v1741, 48
        %v1749 = vpop.permute.xlu0 %1748
        %1750 = vrot.lane.b32.xlu0 %v1742, 48
        %v1751 = vpop.permute.xlu0 %1750
        %v1752 = vsel %vm1623, %v1747, %v1749
        %v1753 = vsel %vm1623, %v1749, %v1751
        %v1757 = vadd.f32 %v1473, %v1752
        %v1758 = vadd.f32 %v1474, %v1753
        %v1759 = vadd.f32 %v1475, %v1751
        %v1760 = vstv %s1738
        %v1761 = vmul.f32 %v1760, %v237
        %v1762 = vmul.f32 %v1760, %v233
        %v1763 = vmul.f32 %v1760, %v238
        %1767 = vrot.lane.b32.xlu0 %v1761, 48
        %v1768 = vpop.permute.xlu0 %1767
        %1769 = vrot.lane.b32.xlu0 %v1762, 48
        %v1770 = vpop.permute.xlu0 %1769
        %1771 = vrot.lane.b32.xlu0 %v1763, 48
        %v1772 = vpop.permute.xlu0 %1771
        %v1773 = vsel %vm1623, %v1768, %v1770
        %v1774 = vsel %vm1623, %v1770, %v1772
        %v1778 = vadd.f32 %v1757, %v1773
        %v1779 = vadd.f32 %v1758, %v1774
        %v1780 = vadd.f32 %v1759, %v1772
        %s1781 = sld [smem:[#allocation2 + $0x27]]
        %s1782 = sld [smem:[#allocation2 + $0x58]]
        %v1783 = vstv %s1781
        %v1784 = vmul.f32 %v1783, %v225
        %v1785 = vmul.f32 %v1783, %v221
        %v1786 = vmul.f32 %v1783, %v226
        %1790 = vrot.lane.b32.xlu0 %v1784, 48
        %v1791 = vpop.permute.xlu0 %1790
        %1792 = vrot.lane.b32.xlu0 %v1785, 48
        %v1793 = vpop.permute.xlu0 %1792
        %1794 = vrot.lane.b32.xlu0 %v1786, 48
        %v1795 = vpop.permute.xlu0 %1794
        %v1796 = vsel %vm1623, %v1791, %v1793
        %v1797 = vsel %vm1623, %v1793, %v1795
        %v1801 = vadd.f32 %v1517, %v1796
        %v1802 = vadd.f32 %v1518, %v1797
        %v1803 = vadd.f32 %v1519, %v1795
        %v1804 = vstv %s1782
        %v1805 = vmul.f32 %v1804, %v237
        %v1806 = vmul.f32 %v1804, %v233
        %v1807 = vmul.f32 %v1804, %v238
        %1811 = vrot.lane.b32.xlu0 %v1805, 48
        %v1812 = vpop.permute.xlu0 %1811
        %1813 = vrot.lane.b32.xlu0 %v1806, 48
        %v1814 = vpop.permute.xlu0 %1813
        %1815 = vrot.lane.b32.xlu0 %v1807, 48
        %v1816 = vpop.permute.xlu0 %1815
        %v1817 = vsel %vm1623, %v1812, %v1814
        %v1818 = vsel %vm1623, %v1814, %v1816
        %v1822 = vadd.f32 %v1801, %v1817
        %v1823 = vadd.f32 %v1802, %v1818
        %v1824 = vadd.f32 %v1803, %v1816
        %s1825 = sld [smem:[#allocation2 + $0x28]]
        %s1826 = sld [smem:[#allocation2 + $0x59]]
        %v1827 = vstv %s1825
        %v1828 = vmul.f32 %v1827, %v225
        %v1829 = vmul.f32 %v1827, %v221
        %v1830 = vmul.f32 %v1827, %v226
        %1834 = vrot.lane.b32.xlu0 %v1828, 48
        %v1835 = vpop.permute.xlu0 %1834
        %1836 = vrot.lane.b32.xlu0 %v1829, 48
        %v1837 = vpop.permute.xlu0 %1836
        %1838 = vrot.lane.b32.xlu0 %v1830, 48
        %v1839 = vpop.permute.xlu0 %1838
        %v1840 = vsel %vm1623, %v1835, %v1837
        %v1841 = vsel %vm1623, %v1837, %v1839
        %v1845 = vadd.f32 %v1561, %v1840
        %v1846 = vadd.f32 %v1562, %v1841
        %v1847 = vadd.f32 %v1563, %v1839
        %v1848 = vstv %s1826
        %v1849 = vmul.f32 %v1848, %v237
        %v1850 = vmul.f32 %v1848, %v233
        %v1851 = vmul.f32 %v1848, %v238
        %1855 = vrot.lane.b32.xlu0 %v1849, 48
        %v1856 = vpop.permute.xlu0 %1855
        %1857 = vrot.lane.b32.xlu0 %v1850, 48
        %v1858 = vpop.permute.xlu0 %1857
        %1859 = vrot.lane.b32.xlu0 %v1851, 48
        %v1860 = vpop.permute.xlu0 %1859
        %v1861 = vsel %vm1623, %v1856, %v1858
        %v1862 = vsel %vm1623, %v1858, %v1860
        %v1866 = vadd.f32 %v1845, %v1861
        %v1867 = vadd.f32 %v1846, %v1862
        %v1868 = vadd.f32 %v1847, %v1860
        %s1869 = sld [smem:[#allocation2 + $0x29]]
        %s1870 = sld [smem:[#allocation2 + $0x5a]]
        %v1871 = vstv %s1869
        %v1872 = vmul.f32 %v1871, %v225
        %v1873 = vmul.f32 %v1871, %v221
        %v1874 = vmul.f32 %v1871, %v226
        %1878 = vrot.lane.b32.xlu0 %v1872, 48
        %v1879 = vpop.permute.xlu0 %1878
        %1880 = vrot.lane.b32.xlu0 %v1873, 48
        %v1881 = vpop.permute.xlu0 %1880
        %1882 = vrot.lane.b32.xlu0 %v1874, 48
        %v1883 = vpop.permute.xlu0 %1882
        %v1884 = vsel %vm1623, %v1879, %v1881
        %v1885 = vsel %vm1623, %v1881, %v1883
        %v1889 = vadd.f32 %v1605, %v1884
        %v1890 = vadd.f32 %v1606, %v1885
        %v1891 = vadd.f32 %v1607, %v1883
        %v1892 = vstv %s1870
        %v1893 = vmul.f32 %v1892, %v237
        %v1894 = vmul.f32 %v1892, %v233
        %v1895 = vmul.f32 %v1892, %v238
        %1899 = vrot.lane.b32.xlu0 %v1893, 48
        %v1900 = vpop.permute.xlu0 %1899
        %1901 = vrot.lane.b32.xlu0 %v1894, 48
        %v1902 = vpop.permute.xlu0 %1901
        %1903 = vrot.lane.b32.xlu0 %v1895, 48
        %v1904 = vpop.permute.xlu0 %1903
        %v1905 = vsel %vm1623, %v1900, %v1902
        %v1906 = vsel %vm1623, %v1902, %v1904
        %v1910 = vadd.f32 %v1889, %v1905
        %v1911 = vadd.f32 %v1890, %v1906
        %v1912 = vadd.f32 %v1891, %v1904
        %s1913 = sld [smem:[#allocation2 + $0x2a]]
        %s1914 = sld [smem:[#allocation2 + $0x5b]]
        %v1915 = vstv %s1913
        %v1916 = vmul.f32 %v1915, %v225
        %v1917 = vmul.f32 %v1915, %v221
        %v1918 = vmul.f32 %v1915, %v226
        %1922 = vrot.lane.b32.xlu0 %v1916, 32
        %v1923 = vpop.permute.xlu0 %1922
        %1924 = vrot.lane.b32.xlu0 %v1917, 32
        %v1925 = vpop.permute.xlu0 %1924
        %1926 = vrot.lane.b32.xlu0 %v1918, 32
        %v1927 = vpop.permute.xlu0 %1926
        %vm1928 = vcmask 261120
        %v1929 = vsel %vm1928, %v1923, %v1925
        %v1930 = vsel %vm1928, %v1925, %v1927
        %v1933 = vadd.f32 %v1647, %v1929
        %v1934 = vadd.f32 %v1648, %v1930
        %v1935 = vstv %s1914
        %v1936 = vmul.f32 %v1935, %v237
        %v1937 = vmul.f32 %v1935, %v233
        %v1938 = vmul.f32 %v1935, %v238
        %1942 = vrot.lane.b32.xlu0 %v1936, 32
        %v1943 = vpop.permute.xlu0 %1942
        %1944 = vrot.lane.b32.xlu0 %v1937, 32
        %v1945 = vpop.permute.xlu0 %1944
        %1946 = vrot.lane.b32.xlu0 %v1938, 32
        %v1947 = vpop.permute.xlu0 %1946
        %v1948 = vsel %vm1928, %v1943, %v1945
        %v1949 = vsel %vm1928, %v1945, %v1947
        %v1952 = vadd.f32 %v1933, %v1948
        %v1953 = vadd.f32 %v1934, %v1949
        %s1954 = sld [smem:[#allocation2 + $0x2b]]
        %s1955 = sld [smem:[#allocation2 + $0x5c]]
        %v1956 = vstv %s1954
        %v1957 = vmul.f32 %v1956, %v225
        %v1958 = vmul.f32 %v1956, %v221
        %v1959 = vmul.f32 %v1956, %v226
        %1963 = vrot.lane.b32.xlu0 %v1957, 32
        %v1964 = vpop.permute.xlu0 %1963
        %1965 = vrot.lane.b32.xlu0 %v1958, 32
        %v1966 = vpop.permute.xlu0 %1965
        %1967 = vrot.lane.b32.xlu0 %v1959, 32
        %v1968 = vpop.permute.xlu0 %1967
        %v1969 = vsel %vm1928, %v1964, %v1966
        %v1970 = vsel %vm1928, %v1966, %v1968
        %v1974 = vadd.f32 %v1690, %v1969
        %v1975 = vadd.f32 %v1691, %v1970
        %v1976 = vadd.f32 %v1692, %v1968
        %v1977 = vstv %s1955
        %v1978 = vmul.f32 %v1977, %v237
        %v1979 = vmul.f32 %v1977, %v233
        %v1980 = vmul.f32 %v1977, %v238
        %1984 = vrot.lane.b32.xlu0 %v1978, 32
        %v1985 = vpop.permute.xlu0 %1984
        %1986 = vrot.lane.b32.xlu0 %v1979, 32
        %v1987 = vpop.permute.xlu0 %1986
        %1988 = vrot.lane.b32.xlu0 %v1980, 32
        %v1989 = vpop.permute.xlu0 %1988
        %v1990 = vsel %vm1928, %v1985, %v1987
        %v1991 = vsel %vm1928, %v1987, %v1989
        %v1995 = vadd.f32 %v1974, %v1990
        %v1996 = vadd.f32 %v1975, %v1991
        %v1997 = vadd.f32 %v1976, %v1989
        %s1998 = sld [smem:[#allocation2 + $0x2c]]
        %s1999 = sld [smem:[#allocation2 + $0x5d]]
        %v2000 = vstv %s1998
        %v2001 = vmul.f32 %v2000, %v225
        %v2002 = vmul.f32 %v2000, %v221
        %v2003 = vmul.f32 %v2000, %v226
        %2007 = vrot.lane.b32.xlu0 %v2001, 32
        %v2008 = vpop.permute.xlu0 %2007
        %2009 = vrot.lane.b32.xlu0 %v2002, 32
        %v2010 = vpop.permute.xlu0 %2009
        %2011 = vrot.lane.b32.xlu0 %v2003, 32
        %v2012 = vpop.permute.xlu0 %2011
        %v2013 = vsel %vm1928, %v2008, %v2010
        %v2014 = vsel %vm1928, %v2010, %v2012
        %v2018 = vadd.f32 %v1734, %v2013
        %v2019 = vadd.f32 %v1735, %v2014
        %v2020 = vadd.f32 %v1736, %v2012
        %v2021 = vstv %s1999
        %v2022 = vmul.f32 %v2021, %v237
        %v2023 = vmul.f32 %v2021, %v233
        %v2024 = vmul.f32 %v2021, %v238
        %2028 = vrot.lane.b32.xlu0 %v2022, 32
        %v2029 = vpop.permute.xlu0 %2028
        %2030 = vrot.lane.b32.xlu0 %v2023, 32
        %v2031 = vpop.permute.xlu0 %2030
        %2032 = vrot.lane.b32.xlu0 %v2024, 32
        %v2033 = vpop.permute.xlu0 %2032
        %v2034 = vsel %vm1928, %v2029, %v2031
        %v2035 = vsel %vm1928, %v2031, %v2033
        %v2039 = vadd.f32 %v2018, %v2034
        %v2040 = vadd.f32 %v2019, %v2035
        %v2041 = vadd.f32 %v2020, %v2033
        %s2042 = sld [smem:[#allocation2 + $0x2d]]
        %s2043 = sld [smem:[#allocation2 + $0x5e]]
        %v2044 = vstv %s2042
        %v2045 = vmul.f32 %v2044, %v225
        %v2046 = vmul.f32 %v2044, %v221
        %v2047 = vmul.f32 %v2044, %v226
        %2051 = vrot.lane.b32.xlu0 %v2045, 32
        %v2052 = vpop.permute.xlu0 %2051
        %2053 = vrot.lane.b32.xlu0 %v2046, 32
        %v2054 = vpop.permute.xlu0 %2053
        %2055 = vrot.lane.b32.xlu0 %v2047, 32
        %v2056 = vpop.permute.xlu0 %2055
        %v2057 = vsel %vm1928, %v2052, %v2054
        %v2058 = vsel %vm1928, %v2054, %v2056
        %v2062 = vadd.f32 %v1778, %v2057
        %v2063 = vadd.f32 %v1779, %v2058
        %v2064 = vadd.f32 %v1780, %v2056
        %v2065 = vstv %s2043
        %v2066 = vmul.f32 %v2065, %v237
        %v2067 = vmul.f32 %v2065, %v233
        %v2068 = vmul.f32 %v2065, %v238
        %2072 = vrot.lane.b32.xlu0 %v2066, 32
        %v2073 = vpop.permute.xlu0 %2072
        %2074 = vrot.lane.b32.xlu0 %v2067, 32
        %v2075 = vpop.permute.xlu0 %2074
        %2076 = vrot.lane.b32.xlu0 %v2068, 32
        %v2077 = vpop.permute.xlu0 %2076
        %v2078 = vsel %vm1928, %v2073, %v2075
        %v2079 = vsel %vm1928, %v2075, %v2077
        %v2083 = vadd.f32 %v2062, %v2078
        %v2084 = vadd.f32 %v2063, %v2079
        %v2085 = vadd.f32 %v2064, %v2077
        %s2086 = sld [smem:[#allocation2 + $0x2e]]
        %s2087 = sld [smem:[#allocation2 + $0x5f]]
        %v2088 = vstv %s2086
        %v2089 = vmul.f32 %v2088, %v225
        %v2090 = vmul.f32 %v2088, %v221
        %v2091 = vmul.f32 %v2088, %v226
        %2095 = vrot.lane.b32.xlu0 %v2089, 32
        %v2096 = vpop.permute.xlu0 %2095
        %2097 = vrot.lane.b32.xlu0 %v2090, 32
        %v2098 = vpop.permute.xlu0 %2097
        %2099 = vrot.lane.b32.xlu0 %v2091, 32
        %v2100 = vpop.permute.xlu0 %2099
        %v2101 = vsel %vm1928, %v2096, %v2098
        %v2102 = vsel %vm1928, %v2098, %v2100
        %v2106 = vadd.f32 %v1822, %v2101
        %v2107 = vadd.f32 %v1823, %v2102
        %v2108 = vadd.f32 %v1824, %v2100
        %v2109 = vstv %s2087
        %v2110 = vmul.f32 %v2109, %v237
        %v2111 = vmul.f32 %v2109, %v233
        %v2112 = vmul.f32 %v2109, %v238
        %2116 = vrot.lane.b32.xlu0 %v2110, 32
        %v2117 = vpop.permute.xlu0 %2116
        %2118 = vrot.lane.b32.xlu0 %v2111, 32
        %v2119 = vpop.permute.xlu0 %2118
        %2120 = vrot.lane.b32.xlu0 %v2112, 32
        %v2121 = vpop.permute.xlu0 %2120
        %v2122 = vsel %vm1928, %v2117, %v2119
        %v2123 = vsel %vm1928, %v2119, %v2121
        %v2127 = vadd.f32 %v2106, %v2122
        %v2128 = vadd.f32 %v2107, %v2123
        %v2129 = vadd.f32 %v2108, %v2121
        %s2130 = sld [smem:[#allocation2 + $0x2f]]
        %s2131 = sld [smem:[#allocation2 + $0x60]]
        %v2132 = vstv %s2130
        %v2133 = vmul.f32 %v2132, %v225
        %v2134 = vmul.f32 %v2132, %v221
        %v2135 = vmul.f32 %v2132, %v226
        %2139 = vrot.lane.b32.xlu0 %v2133, 32
        %v2140 = vpop.permute.xlu0 %2139
        %2141 = vrot.lane.b32.xlu0 %v2134, 32
        %v2142 = vpop.permute.xlu0 %2141
        %2143 = vrot.lane.b32.xlu0 %v2135, 32
        %v2144 = vpop.permute.xlu0 %2143
        %v2145 = vsel %vm1928, %v2140, %v2142
        %v2146 = vsel %vm1928, %v2142, %v2144
        %v2150 = vadd.f32 %v1866, %v2145
        %v2151 = vadd.f32 %v1867, %v2146
        %v2152 = vadd.f32 %v1868, %v2144
        %v2153 = vstv %s2131
        %v2154 = vmul.f32 %v2153, %v237
        %v2155 = vmul.f32 %v2153, %v233
        %v2156 = vmul.f32 %v2153, %v238
        %2160 = vrot.lane.b32.xlu0 %v2154, 32
        %v2161 = vpop.permute.xlu0 %2160
        %2162 = vrot.lane.b32.xlu0 %v2155, 32
        %v2163 = vpop.permute.xlu0 %2162
        %2164 = vrot.lane.b32.xlu0 %v2156, 32
        %v2165 = vpop.permute.xlu0 %2164
        %v2166 = vsel %vm1928, %v2161, %v2163
        %v2167 = vsel %vm1928, %v2163, %v2165
        %v2171 = vadd.f32 %v2150, %v2166
        %v2172 = vadd.f32 %v2151, %v2167
        %v2173 = vadd.f32 %v2152, %v2165
        %s2174 = sld [smem:[#allocation2 + $0x30]]
        %s2175 = sld [smem:[#allocation2 + $0x61]]
        %v2176 = vstv %s2174
        %v2177 = vmul.f32 %v2176, %v225
        %v2178 = vmul.f32 %v2176, %v221
        %v2179 = vmul.f32 %v2176, %v226
        %2183 = vrot.lane.b32.xlu0 %v2177, 32
        %v2184 = vpop.permute.xlu0 %2183
        %2185 = vrot.lane.b32.xlu0 %v2178, 32
        %v2186 = vpop.permute.xlu0 %2185
        %2187 = vrot.lane.b32.xlu0 %v2179, 32
        %v2188 = vpop.permute.xlu0 %2187
        %v2189 = vsel %vm1928, %v2184, %v2186
        %v2190 = vsel %vm1928, %v2186, %v2188
        %v2194 = vadd.f32 %v1910, %v2189
        %v2195 = vadd.f32 %v1911, %v2190
        %v2196 = vadd.f32 %v1912, %v2188
        %v2197 = vstv %s2175
        %v2198 = vmul.f32 %v2197, %v237
        %v2199 = vmul.f32 %v2197, %v233
        %v2200 = vmul.f32 %v2197, %v238
        %2204 = vrot.lane.b32.xlu0 %v2198, 32
        %v2205 = vpop.permute.xlu0 %2204
        %2206 = vrot.lane.b32.xlu0 %v2199, 32
        %v2207 = vpop.permute.xlu0 %2206
        %2208 = vrot.lane.b32.xlu0 %v2200, 32
        %v2209 = vpop.permute.xlu0 %2208
        %v2210 = vsel %vm1928, %v2205, %v2207
        %v2211 = vsel %vm1928, %v2207, %v2209
        %v2215 = vadd.f32 %v2194, %v2210
        %v2216 = vadd.f32 %v2195, %v2211
        %v2217 = vadd.f32 %v2196, %v2209
        %v2218 = vsel %vm248, %v1952, 0.0
        %v2219 = vsel %vm249, %v1953, 0.0
        %v2220 = vadd.f32 %v2218, 0.0
        %v2221 = vadd.f32 %v2219, 0.0
        %2225 = vrot.lane.b32.xlu0 %v1995, 127
        %v2226 = vpop.permute.xlu0 %2225
        %2227 = vrot.lane.b32.xlu0 %v1996, 127
        %v2228 = vpop.permute.xlu0 %2227
        %2229 = vrot.lane.b32.xlu0 %v1997, 127
        %v2230 = vpop.permute.xlu0 %2229
        %vm2231 = vcmask 1039360
        %v2232 = vsel %vm2231, %v2226, %v2228
        %v2233 = vsel %vm2231, %v2228, %v2230
        %v2236 = vsel %vm254, %v2232, 0.0
        %v2237 = vsel %vm255, %v2233, 0.0
        %v2238 = vadd.f32 %v2220, %v2236
        %v2239 = vadd.f32 %v2221, %v2237
        %2243 = vrot.lane.b32.xlu0 %v2039, 126
        %v2244 = vpop.permute.xlu0 %2243
        %2245 = vrot.lane.b32.xlu0 %v2040, 126
        %v2246 = vpop.permute.xlu0 %2245
        %2247 = vrot.lane.b32.xlu0 %v2041, 126
        %v2248 = vpop.permute.xlu0 %2247
        %vm2249 = vcmask 1031168
        %v2250 = vsel %vm2249, %v2244, %v2246
        %v2251 = vsel %vm2249, %v2246, %v2248
        %v2254 = vsel %vm260, %v2250, 0.0
        %v2255 = vsel %vm261, %v2251, 0.0
        %v2256 = vadd.f32 %v2238, %v2254
        %v2257 = vadd.f32 %v2239, %v2255
        %2261 = vrot.lane.b32.xlu0 %v2083, 125
        %v2262 = vpop.permute.xlu0 %2261
        %2263 = vrot.lane.b32.xlu0 %v2084, 125
        %v2264 = vpop.permute.xlu0 %2263
        %2265 = vrot.lane.b32.xlu0 %v2085, 125
        %v2266 = vpop.permute.xlu0 %2265
        %vm2267 = vcmask 1022976
        %v2268 = vsel %vm2267, %v2262, %v2264
        %v2269 = vsel %vm2267, %v2264, %v2266
        %v2272 = vadd.f32 %v2256, %v2268
        %v2273 = vadd.f32 %v2257, %v2269
        %2277 = vrot.lane.b32.xlu0 %v2127, 124
        %v2278 = vpop.permute.xlu0 %2277
        %2279 = vrot.lane.b32.xlu0 %v2128, 124
        %v2280 = vpop.permute.xlu0 %2279
        %2281 = vrot.lane.b32.xlu0 %v2129, 124
        %v2282 = vpop.permute.xlu0 %2281
        %vm2283 = vcmask 1014784
        %v2284 = vsel %vm2283, %v2278, %v2280
        %v2285 = vsel %vm2283, %v2280, %v2282
        %v2288 = vsel %vm266, %v2284, 0.0
        %v2289 = vsel %vm267, %v2285, 0.0
        %v2290 = vadd.f32 %v2272, %v2288
        %v2291 = vadd.f32 %v2273, %v2289
        %2295 = vrot.lane.b32.xlu0 %v2171, 123
        %v2296 = vpop.permute.xlu0 %2295
        %2297 = vrot.lane.b32.xlu0 %v2172, 123
        %v2298 = vpop.permute.xlu0 %2297
        %2299 = vrot.lane.b32.xlu0 %v2173, 123
        %v2300 = vpop.permute.xlu0 %2299
        %vm2301 = vcmask 1006592
        %v2302 = vsel %vm2301, %v2296, %v2298
        %v2303 = vsel %vm2301, %v2298, %v2300
        %v2306 = vsel %vm272, %v2302, 0.0
        %v2307 = vsel %vm273, %v2303, 0.0
        %v2308 = vadd.f32 %v2290, %v2306
        %v2309 = vadd.f32 %v2291, %v2307
        %2313 = vrot.lane.b32.xlu0 %v2215, 122
        %v2314 = vpop.permute.xlu0 %2313
        %2315 = vrot.lane.b32.xlu0 %v2216, 122
        %v2316 = vpop.permute.xlu0 %2315
        %2317 = vrot.lane.b32.xlu0 %v2217, 122
        %v2318 = vpop.permute.xlu0 %2317
        %vm2319 = vcmask 998400
        %v2320 = vsel %vm2319, %v2314, %v2316
        %v2321 = vsel %vm2319, %v2316, %v2318
        %v2324 = vsel %vm278, %v2320, 0.0
        %v2325 = vsel %vm279, %v2321, 0.0
        %v2326 = vadd.f32 %v2308, %v2324
        %v2327 = vadd.f32 %v2309, %v2325
        %v2328 = vxor.u32 %v2326, 2147483648
        %v2329 = vxor.u32 %v2327, 2147483648
        %v2330 = vmul.f32 %v2328, 1.442695
        %v2331 = vpow.pop %v2330
        %v2332 = vmul.f32 %v2329, 1.442695
        %v2333 = vpow.pop %v2332
        %v2334 = vadd.f32 %v2331, 1.0
        %v2335 = vadd.f32 %v2333, 1.0
        %v2336 = vrcp.pop %v2334
        %v2337 = vmul.f32 1.0, %v2336
        %v2338 = vrcp.pop %v2335
        %v2339 = vmul.f32 1.0, %v2338
        %v2340 = vlaneseq
        %v2341 = vshrl.u32 %v2340, 7
        %v2342 = vsub.s32 0, %v2341
        %v2343 = vrot.slane %v2337, %v2342
        %v2344 = vlaneseq
        %v2345 = vshrl.u32 %v2344, 7
        %v2346 = vsub.s32 0, %v2345
        %v2347 = vrot.slane %v2339, %v2346
        %v2350 = vcombine.low %v2343, %v2347
        %v2352 = vmul.f32 %v175, %v2350
        %s2353 = smul.addr %s172, 4
        %s2354 = scalar_lea.vmem %s171, %s2353 [#allocation7]
        %2355 = vst [vmem:[%s2354] sm:$0xff] %v2352
        %s2356 = sand.u32 %s75, 1
        %s2357 = scalar_lea.sflag [#allocation4], %s2356
        %s2358 = sand.u32 %s75, 1
        %s2359 = smul.addr %s2358, 8
        %s2360 = scalar_lea.vmem [#allocation7], %s2359
        // Predicated region
        $region37: #{tpu_custom_call.1} parent=27 // pred_check
          %p2361 = pneg %p85
        $region38: #{tpu_custom_call.1} parent=27 // pred_check_branch
          %2363 = sbr.rel (%p2361) target = $region40
        $region39: #{tpu_custom_call.1} parent=27 // pred_region
          %s2365 = ssub.s32 128, 128
          %2366 = vsyncadd %s2357, %s2365
          %s2367 = smul.addr %s20, 2
          %s2368 = smul.addr %s2367, 64
          %s2369 = scalar_lea.hbm %s2, %s2368
          %s2371 = sshll.u32 %s2360, 4
          %s2372 = int_to_ptr.vmem [resolvable:$true] %s2371
          %2374 = dma.vmem_to_hbm [thread:$0]  %s2372, 128, %s2369, %s2357
        $region40: #{tpu_custom_call.1} parent=27 // pred_fallthru
          _
      $region28: #{tpu_custom_call.1} parent=5 // pred_fallthru
        _
      %p2375 = scmp.le.s32.totalorder 2, %s15
      // Predicated region
      $region41: #{tpu_custom_call.1} parent=5 // pred_check
        %p2376 = pneg %p2375
      $region42: #{tpu_custom_call.1} parent=5 // pred_check_branch
        %2378 = sbr.rel (%p2376) target = $region44
      $region43: #{tpu_custom_call.1} parent=5 // pred_region
        %s2379 = ssub.s32 %s15, 2
        // Predicated region
        $region45: #{tpu_custom_call.1} parent=43 // pred_check
          %p2380 = pneg %p91
        $region46: #{tpu_custom_call.1} parent=43 // pred_check_branch
          %2382 = sbr.rel (%p2380) target = $region48
        $region47: #{tpu_custom_call.1} parent=43 // pred_region
          %s2383 = sand.u32 %s76, 1
          %s2384 = scalar_lea.sflag [#allocation4], %s2383
          %s2385 = sand.u32 %s76, 1
          %s2386 = smul.addr %s2385, 8
          %s2387 = scalar_lea.vmem [#allocation7], %s2386
          %2388 = dma.done %s2384, 128
        $region48: #{tpu_custom_call.1} parent=43 // pred_fallthru
          _
      $region44: #{tpu_custom_call.1} parent=5 // pred_fallthru
        _
    $region6: #{tpu_custom_call.1} parent=1 // loop_footer
      %s19 = sadd.s32 1, %s15
    $region7: #{tpu_custom_call.1} parent=1 // loop_footer_branch
      %14 = sbr.rel target = $region3
    $region8: #{tpu_custom_call.1} parent=1 // loop_exit
      _
    %2389 = vsyncpa [#allocation3], 1
    %s2390 = scalar_lea.sflag [#allocation3], 1
    %2391 = vsyncpa %s2390, 1
    %2392 = vsyncpa [#allocation4], 1
    %s2393 = scalar_lea.sflag [#allocation4], 1
    %2394 = vsyncpa %s2393, 1
    %2395 = vsyncpa [#allocation5], 1
    %s2396 = scalar_lea.sflag [#allocation5], 1
    %2397 = vsyncpa %s2396, 1

</llo_original>
